<compile_context>
chip_gen: v7x
topology: tpu7x:2x2x1
jax: 0.10.0
libtpu: 0.0.40
codegen_flags: <defaults>
</compile_context>

<pallas_src>
import functools

import jax
import jax.numpy as jnp
from jax.experimental import pallas as pl
from jax.experimental.pallas import tpu as pltpu


# ----------------------------------------------------------------------------
# Pallas kernel: full encoder stack.  grid = (batch, layer); one batch element
# per block, the layer axis is sequential with the activation resident in VMEM.
# ----------------------------------------------------------------------------
def _encoder_stack_kernel(n_heads, head_dim,
                          x_ref, mask_ref,
                          wqkv, bqkv, wo, bo,
                          wl1a, wl1b, bl1, wl2a, wl2b, bl2,
                          g1, be1, wf1, bf1, wf2, bf2, g2, be2,
                          o_ref, act_ref):
    layer = pl.program_id(1)
    H = n_heads * head_dim
    hd = head_dim
    S = x_ref.shape[1]

    # First layer of each batch element: pull the embedded activation into the
    # resident VMEM scratch.  Later layers read the previous layer's output.
    @pl.when(layer == 0)
    def _():
        act_ref[...] = x_ref[0]

    x = act_ref[...]                       # (S, H) float32
    m = mask_ref[...]                      # (1, 1, S) int32, 1 = attend

    def linear(v, w_ref, b_ref):
        return (jnp.dot(v, w_ref[0], preferred_element_type=jnp.float32)
                + b_ref[0])

    def layer_norm(v, g_ref, b_ref):       # PyTorch LayerNorm semantics, eps=1e-5
        mu = jnp.mean(v, axis=-1, keepdims=True)
        var = jnp.mean(jnp.square(v - mu), axis=-1, keepdims=True)
        return (v - mu) * jax.lax.rsqrt(var + 1e-5) * g_ref[0] + b_ref[0]

    # ---- multi-head self-attention (fused QKV, heads batched) -----------
    qkv = linear(x, wqkv, bqkv)            # (S, 3H): one MXU matmul
    qkv_t = qkv.T                          # (3H, S): heads now live on sublanes

    # Tile-aligned sublane slices + leading-dim reshapes only (no lane slicing).
    # q needs (nh, S, hd); built from cheap per-head 2-D transposes + a
    # leading-dim stack (guaranteed Mosaic lowering), everything else stays
    # batched across heads.
    q_s = jnp.stack([qkv_t[h * hd:(h + 1) * hd].T for h in range(n_heads)])  # (nh,S,hd)
    k_t = qkv_t[H:2 * H].reshape(n_heads, hd, S)                              # (nh,hd,S)
    v_t = qkv_t[2 * H:3 * H].reshape(n_heads, hd, S)                          # (nh,hd,S)

    inv_scale = 1.0 / (float(head_dim) ** 0.5)
    e = jnp.einsum('hqd,hdk->hqk', q_s, k_t,
                   preferred_element_type=jnp.float32) * inv_scale            # (nh,S,S)
    e = jnp.where(m == 0, jnp.float32(-1e10), e)       # mask keys, all heads at once
    e_max = jnp.max(e, axis=-1, keepdims=True)
    p = jnp.exp(e - e_max)
    attn = p * pl.reciprocal(jnp.sum(p, axis=-1, keepdims=True), approx=True)
    o_t = jnp.einsum('hdk,hqk->hdq', v_t, attn,
                     preferred_element_type=jnp.float32)                      # (nh,hd,S)
    attn_out = o_t.reshape(H, S).T                                            # (S, H)

    # ---- gated output:  sigmoid(l1([fc_o, x])) * l2([fc_o, x]) ----------
    # The concat is eliminated: l1/l2 weights were split into halves at trace
    # time, so cat @ W == xo @ W_top + x @ W_bot.
    xo = linear(attn_out, wo, bo)                                             # fc_o
    gate = jax.nn.sigmoid(
        jnp.dot(xo, wl1a[0], preferred_element_type=jnp.float32)
        + jnp.dot(x, wl1b[0], preferred_element_type=jnp.float32) + bl1[0])
    val = (jnp.dot(xo, wl2a[0], preferred_element_type=jnp.float32)
           + jnp.dot(x, wl2b[0], preferred_element_type=jnp.float32) + bl2[0])
    src = layer_norm(x + gate * val, g1, be1)          # self_attn_layer_norm

    # TODO(synk): the reference's multimodal branch (imgs -> src2_ -> src3) never
    # contributes to the returned tensor, so it is intentionally not computed.

    # ---- position-wise feed-forward (reference applies ReLU after fc_2 too)
    h1 = jnp.maximum(linear(src, wf1, bf1), 0.0)        # relu(fc_1)
    h2 = jnp.maximum(linear(h1, wf2, bf2), 0.0)         # relu(fc_2)
    out = layer_norm(src + h2, g2, be2)                 # ff_layer_norm1

    act_ref[...] = out                                  # feed the next layer
    o_ref[0] = out                                      # resident output block


# ----------------------------------------------------------------------------
# Wrapper: stacks per-layer weights along L, fuses QKV, splits l1/l2 weights,
# and launches a single pallas_call over grid=(B, L).
# ----------------------------------------------------------------------------
def _stack_layer_params(layers):
    H = layers[0]['wq'].shape[0]

    def st(fn):
        return jnp.stack([fn(lp) for lp in layers], axis=0)

    return [
        st(lambda p: jnp.concatenate([p['wq'], p['wk'], p['wv']], axis=1)),  # wqkv (L,H,3H)
        st(lambda p: jnp.concatenate([p['bq'], p['bk'], p['bv']], axis=1)),  # bqkv (L,1,3H)
        st(lambda p: p['wo']),  st(lambda p: p['bo']),
        st(lambda p: p['wl1'][:H]), st(lambda p: p['wl1'][H:]), st(lambda p: p['bl1']),
        st(lambda p: p['wl2'][:H]), st(lambda p: p['wl2'][H:]), st(lambda p: p['bl2']),
        st(lambda p: p['g1']),  st(lambda p: p['be1']),
        st(lambda p: p['wf1']), st(lambda p: p['bf1']),
        st(lambda p: p['wf2']), st(lambda p: p['bf2']),
        st(lambda p: p['g2']),  st(lambda p: p['be2']),
    ]


def encoder_stack_pallas(x, mask3, stacked_weights, n_heads):
    """x: (B, S, H) f32, mask3: (B, 1, S) i32 -> (B, S, H) f32."""
    B, S, H = x.shape
    L = stacked_weights[0].shape[0]
    head_dim = H // n_heads

    def wspec(w):
        return pl.BlockSpec((1,) + w.shape[1:], lambda b, l: (l, 0, 0))

    in_specs = ([pl.BlockSpec((1, S, H), lambda b, l: (b, 0, 0)),   # activation
                 pl.BlockSpec((1, 1, S), lambda b, l: (b, 0, 0))]   # mask
                + [wspec(w) for w in stacked_weights])              # per-layer weights

    kernel = functools.partial(_encoder_stack_kernel, n_heads, head_dim)

    return pl.pallas_call(
        kernel,
        out_shape=jax.ShapeDtypeStruct((B, S, H), jnp.float32),
        grid_spec=pltpu.PrefetchScalarGridSpec(
            num_scalar_prefetch=0,
            grid=(B, L),                      # layer axis innermost (sequential)
            in_specs=in_specs,
            out_specs=pl.BlockSpec((1, S, H), lambda b, l: (b, 0, 0)),
            scratch_shapes=[pltpu.VMEM((S, H), jnp.float32)],   # resident activation
        ),
        compiler_params=pltpu.CompilerParams(
            dimension_semantics=("parallel", "arbitrary")),
    )(x, mask3, *stacked_weights)


# ----------------------------------------------------------------------------
# Plain-JAX glue: embeddings + weight stacking (mirrors Encoder.forward).
# ----------------------------------------------------------------------------
def encoder_forward(params, src_ids, src_mask, imgs, n_heads):
    del imgs  # only feeds the dead multimodal branch (see TODO in kernel)
    B, S = src_ids.shape
    H = params['tok_emb'].shape[1]
    tok = jnp.take(params['tok_emb'], src_ids, axis=0)          # (B, S, H)
    pos = params['pos_emb'][:S][None, :, :]                     # (1, S, H)
    x = tok * jnp.sqrt(jnp.float32(H)) + pos                    # dropout = identity
    mask3 = src_mask.reshape(B, 1, S).astype(jnp.int32)
    stacked = _stack_layer_params(params['layers'])
    return encoder_stack_pallas(x, mask3, stacked, n_heads)


encoder_forward = jax.jit(encoder_forward, static_argnames=("n_heads",))


# ----------------------------------------------------------------------------
# Deterministic parameter init (shapes from the module's __init__).
# ----------------------------------------------------------------------------
def init_params(key, input_dim, hid_dim, n_layers, pf_dim, max_length=302):
    def nrm(k, shape, scale=0.05):
        return scale * jax.random.normal(k, shape, dtype=jnp.float32)

    keys = iter(jax.random.split(key, 2 + n_layers * 20))
    H, PF = hid_dim, pf_dim
    params = {
        'tok_emb': nrm(next(keys), (input_dim, H), 0.1),
        'pos_emb': nrm(next(keys), (max_length, H), 0.1),
        'layers': [],
    }
    for _ in range(n_layers):
        lp = dict(
            wq=nrm(next(keys), (H, H)),       bq=nrm(next(keys), (1, H)),
            wk=nrm(next(keys), (H, H)),       bk=nrm(next(keys), (1, H)),
            wv=nrm(next(keys), (H, H)),       bv=nrm(next(keys), (1, H)),
            wo=nrm(next(keys), (H, H)),       bo=nrm(next(keys), (1, H)),
            wl1=nrm(next(keys), (2 * H, H)),  bl1=nrm(next(keys), (1, H)),
            wl2=nrm(next(keys), (2 * H, H)),  bl2=nrm(next(keys), (1, H)),
            g1=jnp.ones((1, H), jnp.float32), be1=jnp.zeros((1, H), jnp.float32),
            wf1=nrm(next(keys), (H, PF)),     bf1=nrm(next(keys), (1, PF)),
            wf2=nrm(next(keys), (PF, H)),     bf2=nrm(next(keys), (1, H)),
            g2=jnp.ones((1, H), jnp.float32), be2=jnp.zeros((1, H), jnp.float32),
        )
        params['layers'].append(lp)
    return params


if __name__ == "__main__":
    INPUT_DIM, HID_DIM, N_LAYERS, N_HEADS, PF_DIM = 50, 32, 2, 4, 64
    B, S, N_IMG = 2, 8, 5

    root = jax.random.PRNGKey(0)
    pkey, skey, ikey = jax.random.split(root, 3)

    params = init_params(pkey, INPUT_DIM, HID_DIM, N_LAYERS, PF_DIM)
    src = jax.random.randint(skey, (B, S), 0, INPUT_DIM, dtype=jnp.int32)
    # 1 = valid token, 0 = padding (second example has 2 padded positions)
    src_mask = jnp.array([[1] * S, [1] * (S - 2) + [0] * 2], dtype=jnp.int32)
    imgs = jax.random.normal(ikey, (B, N_IMG, HID_DIM), dtype=jnp.float32)

    out = encoder_forward(params, src, src_mask, imgs, n_heads=N_HEADS)
    out = jax.block_until_ready(out)
    assert out.shape == (B, S, HID_DIM) and out.dtype == jnp.float32
    assert bool(jnp.all(jnp.isfinite(out)))
    print("KERNEL_OK")
</pallas_src>

<mosaic_0001>
module attributes {stable_mosaic.version = 11 : i64} {
  func.func @_encoder_stack_kernel(%arg0: i32, %arg1: i32, %arg2: memref<1x8x32xf32, #tpu.memory_space<vmem>>, %arg3: memref<1x1x8xi32, #tpu.memory_space<vmem>>, %arg4: memref<1x32x96xf32, #tpu.memory_space<vmem>>, %arg5: memref<1x1x96xf32, #tpu.memory_space<vmem>>, %arg6: memref<1x32x32xf32, #tpu.memory_space<vmem>>, %arg7: memref<1x1x32xf32, #tpu.memory_space<vmem>>, %arg8: memref<1x32x32xf32, #tpu.memory_space<vmem>>, %arg9: memref<1x32x32xf32, #tpu.memory_space<vmem>>, %arg10: memref<1x1x32xf32, #tpu.memory_space<vmem>>, %arg11: memref<1x32x32xf32, #tpu.memory_space<vmem>>, %arg12: memref<1x32x32xf32, #tpu.memory_space<vmem>>, %arg13: memref<1x1x32xf32, #tpu.memory_space<vmem>>, %arg14: memref<1x1x32xf32, #tpu.memory_space<vmem>>, %arg15: memref<1x1x32xf32, #tpu.memory_space<vmem>>, %arg16: memref<1x32x64xf32, #tpu.memory_space<vmem>>, %arg17: memref<1x1x64xf32, #tpu.memory_space<vmem>>, %arg18: memref<1x64x32xf32, #tpu.memory_space<vmem>>, %arg19: memref<1x1x32xf32, #tpu.memory_space<vmem>>, %arg20: memref<1x1x32xf32, #tpu.memory_space<vmem>>, %arg21: memref<1x1x32xf32, #tpu.memory_space<vmem>>, %arg22: memref<1x8x32xf32, #tpu.memory_space<vmem>>, %arg23: memref<8x32xf32, #tpu.memory_space<vmem>>) attributes {dimension_semantics = [#tpu.dimension_semantics<parallel>, #tpu.dimension_semantics<arbitrary>], iteration_bounds = array<i64: 2, 2>, scalar_prefetch = 0 : i64, scratch_operands = 1 : i64, tpu.core_type = #tpu.core_type<tc>, window_params = [{transform_indices = @transform_0, window_bounds = array<i64: 1, 8, 32>}, {transform_indices = @transform_1, window_bounds = array<i64: 1, 1, 8>}, {transform_indices = @transform_2, window_bounds = array<i64: 1, 32, 96>}, {transform_indices = @transform_3, window_bounds = array<i64: 1, 1, 96>}, {transform_indices = @transform_4, window_bounds = array<i64: 1, 32, 32>}, {transform_indices = @transform_5, window_bounds = array<i64: 1, 1, 32>}, {transform_indices = @transform_6, window_bounds = array<i64: 1, 32, 32>}, {transform_indices = @transform_7, window_bounds = array<i64: 1, 32, 32>}, {transform_indices = @transform_8, window_bounds = array<i64: 1, 1, 32>}, {transform_indices = @transform_9, window_bounds = array<i64: 1, 32, 32>}, {transform_indices = @transform_10, window_bounds = array<i64: 1, 32, 32>}, {transform_indices = @transform_11, window_bounds = array<i64: 1, 1, 32>}, {transform_indices = @transform_12, window_bounds = array<i64: 1, 1, 32>}, {transform_indices = @transform_13, window_bounds = array<i64: 1, 1, 32>}, {transform_indices = @transform_14, window_bounds = array<i64: 1, 32, 64>}, {transform_indices = @transform_15, window_bounds = array<i64: 1, 1, 64>}, {transform_indices = @transform_16, window_bounds = array<i64: 1, 64, 32>}, {transform_indices = @transform_17, window_bounds = array<i64: 1, 1, 32>}, {transform_indices = @transform_18, window_bounds = array<i64: 1, 1, 32>}, {transform_indices = @transform_19, window_bounds = array<i64: 1, 1, 32>}, {transform_indices = @transform_20, window_bounds = array<i64: 1, 8, 32>}]} {
    %c0_i32 = arith.constant 0 : i32
    %0 = arith.cmpi eq, %arg1, %c0_i32 : i32
    %1 = arith.extui %0 : i1 to i32
    %c0_i32_0 = arith.constant 0 : i32
    %2 = arith.cmpi ne, %1, %c0_i32_0 : i32
    scf.if %2 {
      %c0_91 = arith.constant 0 : index
      %c0_92 = arith.constant 0 : index
      %c0_93 = arith.constant 0 : index
      %163 = vector.load %arg2[%c0_91, %c0_92, %c0_93] : memref<1x8x32xf32, #tpu.memory_space<vmem>>, vector<1x8x32xf32>
      %164 = vector.shape_cast %163 : vector<1x8x32xf32> to vector<8x32xf32>
      %c0_94 = arith.constant 0 : index
      %c0_95 = arith.constant 0 : index
      %165 = vector.load %arg23[%c0_94, %c0_95] : memref<8x32xf32, #tpu.memory_space<vmem>>, vector<8x32xf32>
      tpu.vector_store %arg23[%c0_94, %c0_95], %164 {strides = array<i32>} : memref<8x32xf32, #tpu.memory_space<vmem>>, vector<8x32xf32>,
    } else {
    }
    %c0 = arith.constant 0 : index
    %c0_1 = arith.constant 0 : index
    %3 = vector.load %arg23[%c0, %c0_1] : memref<8x32xf32, #tpu.memory_space<vmem>>, vector<8x32xf32>
    %c0_2 = arith.constant 0 : index
    %c0_3 = arith.constant 0 : index
    %c0_4 = arith.constant 0 : index
    %4 = vector.load %arg3[%c0_2, %c0_3, %c0_4] : memref<1x1x8xi32, #tpu.memory_space<vmem>>, vector<1x1x8xi32>
    %c0_5 = arith.constant 0 : index
    %c0_6 = arith.constant 0 : index
    %c0_7 = arith.constant 0 : index
    %5 = vector.load %arg4[%c0_5, %c0_6, %c0_7] : memref<1x32x96xf32, #tpu.memory_space<vmem>>, vector<1x32x96xf32>
    %6 = vector.shape_cast %5 : vector<1x32x96xf32> to vector<32x96xf32>
    %cst = arith.constant dense<0.000000e+00> : vector<8x96xf32>
    %7 = tpu.matmul %3, %6, %cst {dimension_numbers = #tpu.dot_dimension_numbers<[1], [0], [0], [1], [0, 0, 1, 1], [], []>} : vector<8x32xf32>, vector<32x96xf32>, vector<8x96xf32> -> vector<8x96xf32>
    %c0_8 = arith.constant 0 : index
    %c0_9 = arith.constant 0 : index
    %c0_10 = arith.constant 0 : index
    %8 = vector.load %arg5[%c0_8, %c0_9, %c0_10] : memref<1x1x96xf32, #tpu.memory_space<vmem>>, vector<1x1x96xf32>
    %9 = vector.shape_cast %8 : vector<1x1x96xf32> to vector<1x96xf32>
    %10 = vector.broadcast %9 : vector<1x96xf32> to vector<8x96xf32>
    %11 = arith.addf %7, %10 : vector<8x96xf32>
    %12 = tpu.transpose %11, [1, 0] : vector<8x96xf32> -> vector<96x8xf32>
    %13 = vector.extract_strided_slice %12 {offsets = [0, 0], sizes = [8, 8], strides = [1, 1]} : vector<96x8xf32> to vector<8x8xf32>
    %14 = tpu.transpose %13, [1, 0] : vector<8x8xf32> -> vector<8x8xf32>
    %15 = vector.extract_strided_slice %12 {offsets = [8, 0], sizes = [8, 8], strides = [1, 1]} : vector<96x8xf32> to vector<8x8xf32>
    %16 = tpu.transpose %15, [1, 0] : vector<8x8xf32> -> vector<8x8xf32>
    %17 = vector.extract_strided_slice %12 {offsets = [16, 0], sizes = [8, 8], strides = [1, 1]} : vector<96x8xf32> to vector<8x8xf32>
    %18 = tpu.transpose %17, [1, 0] : vector<8x8xf32> -> vector<8x8xf32>
    %19 = vector.extract_strided_slice %12 {offsets = [24, 0], sizes = [8, 8], strides = [1, 1]} : vector<96x8xf32> to vector<8x8xf32>
    %20 = tpu.transpose %19, [1, 0] : vector<8x8xf32> -> vector<8x8xf32>
    %21 = vector.shape_cast %14 : vector<8x8xf32> to vector<1x8x8xf32>
    %22 = vector.shape_cast %16 : vector<8x8xf32> to vector<1x8x8xf32>
    %23 = vector.shape_cast %18 : vector<8x8xf32> to vector<1x8x8xf32>
    %24 = vector.shape_cast %20 : vector<8x8xf32> to vector<1x8x8xf32>
    %25 = tpu.concatenate %21, %22, %23, %24 in 0 : vector<1x8x8xf32>, vector<1x8x8xf32>, vector<1x8x8xf32>, vector<1x8x8xf32> -> vector<4x8x8xf32>
    %26 = vector.extract_strided_slice %12 {offsets = [32, 0], sizes = [32, 8], strides = [1, 1]} : vector<96x8xf32> to vector<32x8xf32>
    %27 = vector.shape_cast %26 : vector<32x8xf32> to vector<4x8x8xf32>
    %28 = vector.extract_strided_slice %12 {offsets = [64, 0], sizes = [32, 8], strides = [1, 1]} : vector<96x8xf32> to vector<32x8xf32>
    %29 = vector.shape_cast %28 : vector<32x8xf32> to vector<4x8x8xf32>
    "tpu.trace_start"() <{level = 10 : i32, message = "hqd,hdk->hqk"}> : () -> ()
    %cst_11 = arith.constant dense<0.000000e+00> : vector<4x8x8xf32>
    %30 = tpu.matmul %25, %27, %cst_11 {dimension_numbers = #tpu.dot_dimension_numbers<[2], [1], [1], [2], [0, 0, 0, 1, 1, 2], [0], [0]>} : vector<4x8x8xf32>, vector<4x8x8xf32>, vector<4x8x8xf32> -> vector<4x8x8xf32>
    "tpu.trace_stop"() : () -> ()
    %cst_12 = arith.constant 0.353553385 : f32
    %31 = vector.broadcast %cst_12 : f32 to vector<4x8x8xf32>
    %32 = arith.mulf %30, %31 : vector<4x8x8xf32>
    %c0_i32_13 = arith.constant 0 : i32
    %33 = vector.broadcast %c0_i32_13 : i32 to vector<1x1x8xi32>
    %34 = arith.cmpi eq, %4, %33 : vector<1x1x8xi32>
    %cst_14 = arith.constant -1.000000e+10 : f32
    %35 = vector.shape_cast %34 : vector<1x1x8xi1> to vector<1x1x8xi1>
    %36 = vector.broadcast %35 : vector<1x1x8xi1> to vector<4x8x8xi1>
    %37 = vector.broadcast %cst_14 : f32 to vector<4x8x8xf32>
    %38 = arith.select %36, %37, %32 : vector<4x8x8xi1>, vector<4x8x8xf32>
    %cst_15 = arith.constant dense<0xFF800000> : vector<4x8xf32>
    %39 = vector.multi_reduction <maximumf>, %38, %cst_15 [2] : vector<4x8x8xf32> to vector<4x8xf32>
    %40 = vector.shape_cast %39 : vector<4x8xf32> to vector<4x8x1xf32>
    %41 = vector.broadcast %40 : vector<4x8x1xf32> to vector<4x8x8xf32>
    %42 = arith.subf %38, %41 : vector<4x8x8xf32>
    %43 = math.exp %42 : vector<4x8x8xf32>
    %cst_16 = arith.constant dense<0.000000e+00> : vector<4x8xf32>
    %44 = vector.multi_reduction <add>, %43, %cst_16 [2] : vector<4x8x8xf32> to vector<4x8xf32>
    %45 = vector.shape_cast %44 : vector<4x8xf32> to vector<4x8x1xf32>
    %46 = tpu.reciprocal %45 {approx = true} : vector<4x8x1xf32> -> vector<4x8x1xf32>
    %47 = vector.broadcast %46 : vector<4x8x1xf32> to vector<4x8x8xf32>
    %48 = arith.mulf %43, %47 : vector<4x8x8xf32>
    "tpu.trace_start"() <{level = 10 : i32, message = "hdk,hqk->hdq"}> : () -> ()
    %cst_17 = arith.constant dense<0.000000e+00> : vector<4x8x8xf32>
    %49 = tpu.matmul %29, %48, %cst_17 {dimension_numbers = #tpu.dot_dimension_numbers<[2], [2], [1], [1], [0, 0, 0, 1, 1, 1], [0], [0]>} : vector<4x8x8xf32>, vector<4x8x8xf32>, vector<4x8x8xf32> -> vector<4x8x8xf32>
    "tpu.trace_stop"() : () -> ()
    %50 = vector.shape_cast %49 : vector<4x8x8xf32> to vector<32x8xf32>
    %51 = tpu.transpose %50, [1, 0] : vector<32x8xf32> -> vector<8x32xf32>
    %c0_18 = arith.constant 0 : index
    %c0_19 = arith.constant 0 : index
    %c0_20 = arith.constant 0 : index
    %52 = vector.load %arg6[%c0_18, %c0_19, %c0_20] : memref<1x32x32xf32, #tpu.memory_space<vmem>>, vector<1x32x32xf32>
    %53 = vector.shape_cast %52 : vector<1x32x32xf32> to vector<32x32xf32>
    %cst_21 = arith.constant dense<0.000000e+00> : vector<8x32xf32>
    %54 = tpu.matmul %51, %53, %cst_21 {dimension_numbers = #tpu.dot_dimension_numbers<[1], [0], [0], [1], [0, 0, 1, 1], [], []>} : vector<8x32xf32>, vector<32x32xf32>, vector<8x32xf32> -> vector<8x32xf32>
    %c0_22 = arith.constant 0 : index
    %c0_23 = arith.constant 0 : index
    %c0_24 = arith.constant 0 : index
    %55 = vector.load %arg7[%c0_22, %c0_23, %c0_24] : memref<1x1x32xf32, #tpu.memory_space<vmem>>, vector<1x1x32xf32>
    %56 = vector.shape_cast %55 : vector<1x1x32xf32> to vector<1x32xf32>
    %57 = vector.broadcast %56 : vector<1x32xf32> to vector<8x32xf32>
    %58 = arith.addf %54, %57 : vector<8x32xf32>
    %c0_25 = arith.constant 0 : index
    %c0_26 = arith.constant 0 : index
    %c0_27 = arith.constant 0 : index
    %59 = vector.load %arg8[%c0_25, %c0_26, %c0_27] : memref<1x32x32xf32, #tpu.memory_space<vmem>>, vector<1x32x32xf32>
    %60 = vector.shape_cast %59 : vector<1x32x32xf32> to vector<32x32xf32>
    %cst_28 = arith.constant dense<0.000000e+00> : vector<8x32xf32>
    %61 = tpu.matmul %58, %60, %cst_28 {dimension_numbers = #tpu.dot_dimension_numbers<[1], [0], [0], [1], [0, 0, 1, 1], [], []>} : vector<8x32xf32>, vector<32x32xf32>, vector<8x32xf32> -> vector<8x32xf32>
    %c0_29 = arith.constant 0 : index
    %c0_30 = arith.constant 0 : index
    %c0_31 = arith.constant 0 : index
    %62 = vector.load %arg9[%c0_29, %c0_30, %c0_31] : memref<1x32x32xf32, #tpu.memory_space<vmem>>, vector<1x32x32xf32>
    %63 = vector.shape_cast %62 : vector<1x32x32xf32> to vector<32x32xf32>
    %cst_32 = arith.constant dense<0.000000e+00> : vector<8x32xf32>
    %64 = tpu.matmul %3, %63, %cst_32 {dimension_numbers = #tpu.dot_dimension_numbers<[1], [0], [0], [1], [0, 0, 1, 1], [], []>} : vector<8x32xf32>, vector<32x32xf32>, vector<8x32xf32> -> vector<8x32xf32>
    %65 = arith.addf %61, %64 : vector<8x32xf32>
    %c0_33 = arith.constant 0 : index
    %c0_34 = arith.constant 0 : index
    %c0_35 = arith.constant 0 : index
    %66 = vector.load %arg10[%c0_33, %c0_34, %c0_35] : memref<1x1x32xf32, #tpu.memory_space<vmem>>, vector<1x1x32xf32>
    %67 = vector.shape_cast %66 : vector<1x1x32xf32> to vector<1x32xf32>
    %68 = vector.broadcast %67 : vector<1x32xf32> to vector<8x32xf32>
    %69 = arith.addf %65, %68 : vector<8x32xf32>
    %70 = arith.negf %69 : vector<8x32xf32>
    %71 = math.exp %70 : vector<8x32xf32>
    %cst_36 = arith.constant 1.000000e+00 : f32
    %72 = vector.broadcast %cst_36 : f32 to vector<8x32xf32>
    %73 = arith.addf %72, %71 : vector<8x32xf32>
    %74 = arith.divf %72, %73 : vector<8x32xf32>
    %c0_37 = arith.constant 0 : index
    %c0_38 = arith.constant 0 : index
    %c0_39 = arith.constant 0 : index
    %75 = vector.load %arg11[%c0_37, %c0_38, %c0_39] : memref<1x32x32xf32, #tpu.memory_space<vmem>>, vector<1x32x32xf32>
    %76 = vector.shape_cast %75 : vector<1x32x32xf32> to vector<32x32xf32>
    %cst_40 = arith.constant dense<0.000000e+00> : vector<8x32xf32>
    %77 = tpu.matmul %58, %76, %cst_40 {dimension_numbers = #tpu.dot_dimension_numbers<[1], [0], [0], [1], [0, 0, 1, 1], [], []>} : vector<8x32xf32>, vector<32x32xf32>, vector<8x32xf32> -> vector<8x32xf32>
    %c0_41 = arith.constant 0 : index
    %c0_42 = arith.constant 0 : index
    %c0_43 = arith.constant 0 : index
    %78 = vector.load %arg12[%c0_41, %c0_42, %c0_43] : memref<1x32x32xf32, #tpu.memory_space<vmem>>, vector<1x32x32xf32>
    %79 = vector.shape_cast %78 : vector<1x32x32xf32> to vector<32x32xf32>
    %cst_44 = arith.constant dense<0.000000e+00> : vector<8x32xf32>
    %80 = tpu.matmul %3, %79, %cst_44 {dimension_numbers = #tpu.dot_dimension_numbers<[1], [0], [0], [1], [0, 0, 1, 1], [], []>} : vector<8x32xf32>, vector<32x32xf32>, vector<8x32xf32> -> vector<8x32xf32>
    %81 = arith.addf %77, %80 : vector<8x32xf32>
    %c0_45 = arith.constant 0 : index
    %c0_46 = arith.constant 0 : index
    %c0_47 = arith.constant 0 : index
    %82 = vector.load %arg13[%c0_45, %c0_46, %c0_47] : memref<1x1x32xf32, #tpu.memory_space<vmem>>, vector<1x1x32xf32>
    %83 = vector.shape_cast %82 : vector<1x1x32xf32> to vector<1x32xf32>
    %84 = vector.broadcast %83 : vector<1x32xf32> to vector<8x32xf32>
    %85 = arith.addf %81, %84 : vector<8x32xf32>
    %86 = arith.mulf %74, %85 : vector<8x32xf32>
    %87 = arith.addf %3, %86 : vector<8x32xf32>
    %cst_48 = arith.constant dense<0.000000e+00> : vector<8xf32>
    %88 = vector.multi_reduction <add>, %87, %cst_48 [1] : vector<8x32xf32> to vector<8xf32>
    %89 = vector.shape_cast %88 : vector<8xf32> to vector<8x1xf32>
    %cst_49 = arith.constant 3.200000e+01 : f32
    %90 = vector.broadcast %cst_49 : f32 to vector<8x1xf32>
    %91 = arith.divf %89, %90 : vector<8x1xf32>
    %92 = vector.broadcast %91 : vector<8x1xf32> to vector<8x32xf32>
    %93 = arith.subf %87, %92 : vector<8x32xf32>
    %94 = arith.mulf %93, %93 : vector<8x32xf32>
    %cst_50 = arith.constant dense<0.000000e+00> : vector<8xf32>
    %95 = vector.multi_reduction <add>, %94, %cst_50 [1] : vector<8x32xf32> to vector<8xf32>
    %96 = vector.shape_cast %95 : vector<8xf32> to vector<8x1xf32>
    %cst_51 = arith.constant 3.200000e+01 : f32
    %97 = vector.broadcast %cst_51 : f32 to vector<8x1xf32>
    %98 = arith.divf %96, %97 : vector<8x1xf32>
    %99 = vector.broadcast %91 : vector<8x1xf32> to vector<8x32xf32>
    %100 = arith.subf %87, %99 : vector<8x32xf32>
    %cst_52 = arith.constant 9.99999974E-6 : f32
    %101 = vector.broadcast %cst_52 : f32 to vector<8x1xf32>
    %102 = arith.addf %98, %101 : vector<8x1xf32>
    %103 = math.rsqrt %102 : vector<8x1xf32>
    %104 = vector.broadcast %103 : vector<8x1xf32> to vector<8x32xf32>
    %105 = arith.mulf %100, %104 : vector<8x32xf32>
    %c0_53 = arith.constant 0 : index
    %c0_54 = arith.constant 0 : index
    %c0_55 = arith.constant 0 : index
    %106 = vector.load %arg14[%c0_53, %c0_54, %c0_55] : memref<1x1x32xf32, #tpu.memory_space<vmem>>, vector<1x1x32xf32>
    %107 = vector.shape_cast %106 : vector<1x1x32xf32> to vector<1x32xf32>
    %108 = vector.broadcast %107 : vector<1x32xf32> to vector<8x32xf32>
    %109 = arith.mulf %105, %108 : vector<8x32xf32>
    %c0_56 = arith.constant 0 : index
    %c0_57 = arith.constant 0 : index
    %c0_58 = arith.constant 0 : index
    %110 = vector.load %arg15[%c0_56, %c0_57, %c0_58] : memref<1x1x32xf32, #tpu.memory_space<vmem>>, vector<1x1x32xf32>
    %111 = vector.shape_cast %110 : vector<1x1x32xf32> to vector<1x32xf32>
    %112 = vector.broadcast %111 : vector<1x32xf32> to vector<8x32xf32>
    %113 = arith.addf %109, %112 : vector<8x32xf32>
    %c0_59 = arith.constant 0 : index
    %c0_60 = arith.constant 0 : index
    %c0_61 = arith.constant 0 : index
    %114 = vector.load %arg16[%c0_59, %c0_60, %c0_61] : memref<1x32x64xf32, #tpu.memory_space<vmem>>, vector<1x32x64xf32>
    %115 = vector.shape_cast %114 : vector<1x32x64xf32> to vector<32x64xf32>
    %cst_62 = arith.constant dense<0.000000e+00> : vector<8x64xf32>
    %116 = tpu.matmul %113, %115, %cst_62 {dimension_numbers = #tpu.dot_dimension_numbers<[1], [0], [0], [1], [0, 0, 1, 1], [], []>} : vector<8x32xf32>, vector<32x64xf32>, vector<8x64xf32> -> vector<8x64xf32>
    %c0_63 = arith.constant 0 : index
    %c0_64 = arith.constant 0 : index
    %c0_65 = arith.constant 0 : index
    %117 = vector.load %arg17[%c0_63, %c0_64, %c0_65] : memref<1x1x64xf32, #tpu.memory_space<vmem>>, vector<1x1x64xf32>
    %118 = vector.shape_cast %117 : vector<1x1x64xf32> to vector<1x64xf32>
    %119 = vector.broadcast %118 : vector<1x64xf32> to vector<8x64xf32>
    %120 = arith.addf %116, %119 : vector<8x64xf32>
    %cst_66 = arith.constant 0.000000e+00 : f32
    %121 = vector.broadcast %cst_66 : f32 to vector<8x64xf32>
    %122 = arith.maximumf %120, %121 : vector<8x64xf32>
    %c0_67 = arith.constant 0 : index
    %c0_68 = arith.constant 0 : index
    %c0_69 = arith.constant 0 : index
    %123 = vector.load %arg18[%c0_67, %c0_68, %c0_69] : memref<1x64x32xf32, #tpu.memory_space<vmem>>, vector<1x64x32xf32>
    %124 = vector.shape_cast %123 : vector<1x64x32xf32> to vector<64x32xf32>
    %cst_70 = arith.constant dense<0.000000e+00> : vector<8x32xf32>
    %125 = tpu.matmul %122, %124, %cst_70 {dimension_numbers = #tpu.dot_dimension_numbers<[1], [0], [0], [1], [0, 0, 1, 1], [], []>} : vector<8x64xf32>, vector<64x32xf32>, vector<8x32xf32> -> vector<8x32xf32>
    %c0_71 = arith.constant 0 : index
    %c0_72 = arith.constant 0 : index
    %c0_73 = arith.constant 0 : index
    %126 = vector.load %arg19[%c0_71, %c0_72, %c0_73] : memref<1x1x32xf32, #tpu.memory_space<vmem>>, vector<1x1x32xf32>
    %127 = vector.shape_cast %126 : vector<1x1x32xf32> to vector<1x32xf32>
    %128 = vector.broadcast %127 : vector<1x32xf32> to vector<8x32xf32>
    %129 = arith.addf %125, %128 : vector<8x32xf32>
    %cst_74 = arith.constant 0.000000e+00 : f32
    %130 = vector.broadcast %cst_74 : f32 to vector<8x32xf32>
    %131 = arith.maximumf %129, %130 : vector<8x32xf32>
    %132 = arith.addf %113, %131 : vector<8x32xf32>
    %cst_75 = arith.constant dense<0.000000e+00> : vector<8xf32>
    %133 = vector.multi_reduction <add>, %132, %cst_75 [1] : vector<8x32xf32> to vector<8xf32>
    %134 = vector.shape_cast %133 : vector<8xf32> to vector<8x1xf32>
    %cst_76 = arith.constant 3.200000e+01 : f32
    %135 = vector.broadcast %cst_76 : f32 to vector<8x1xf32>
    %136 = arith.divf %134, %135 : vector<8x1xf32>
    %137 = vector.broadcast %136 : vector<8x1xf32> to vector<8x32xf32>
    %138 = arith.subf %132, %137 : vector<8x32xf32>
    %139 = arith.mulf %138, %138 : vector<8x32xf32>
    %cst_77 = arith.constant dense<0.000000e+00> : vector<8xf32>
    %140 = vector.multi_reduction <add>, %139, %cst_77 [1] : vector<8x32xf32> to vector<8xf32>
    %141 = vector.shape_cast %140 : vector<8xf32> to vector<8x1xf32>
    %cst_78 = arith.constant 3.200000e+01 : f32
    %142 = vector.broadcast %cst_78 : f32 to vector<8x1xf32>
    %143 = arith.divf %141, %142 : vector<8x1xf32>
    %144 = vector.broadcast %136 : vector<8x1xf32> to vector<8x32xf32>
    %145 = arith.subf %132, %144 : vector<8x32xf32>
    %cst_79 = arith.constant 9.99999974E-6 : f32
    %146 = vector.broadcast %cst_79 : f32 to vector<8x1xf32>
    %147 = arith.addf %143, %146 : vector<8x1xf32>
    %148 = math.rsqrt %147 : vector<8x1xf32>
    %149 = vector.broadcast %148 : vector<8x1xf32> to vector<8x32xf32>
    %150 = arith.mulf %145, %149 : vector<8x32xf32>
    %c0_80 = arith.constant 0 : index
    %c0_81 = arith.constant 0 : index
    %c0_82 = arith.constant 0 : index
    %151 = vector.load %arg20[%c0_80, %c0_81, %c0_82] : memref<1x1x32xf32, #tpu.memory_space<vmem>>, vector<1x1x32xf32>
    %152 = vector.shape_cast %151 : vector<1x1x32xf32> to vector<1x32xf32>
    %153 = vector.broadcast %152 : vector<1x32xf32> to vector<8x32xf32>
    %154 = arith.mulf %150, %153 : vector<8x32xf32>
    %c0_83 = arith.constant 0 : index
    %c0_84 = arith.constant 0 : index
    %c0_85 = arith.constant 0 : index
    %155 = vector.load %arg21[%c0_83, %c0_84, %c0_85] : memref<1x1x32xf32, #tpu.memory_space<vmem>>, vector<1x1x32xf32>
    %156 = vector.shape_cast %155 : vector<1x1x32xf32> to vector<1x32xf32>
    %157 = vector.broadcast %156 : vector<1x32xf32> to vector<8x32xf32>
    %158 = arith.addf %154, %157 : vector<8x32xf32>
    %c0_86 = arith.constant 0 : index
    %c0_87 = arith.constant 0 : index
    %159 = vector.load %arg23[%c0_86, %c0_87] : memref<8x32xf32, #tpu.memory_space<vmem>>, vector<8x32xf32>
    tpu.vector_store %arg23[%c0_86, %c0_87], %158 {strides = array<i32>} : memref<8x32xf32, #tpu.memory_space<vmem>>, vector<8x32xf32>,
    %c0_88 = arith.constant 0 : index
    %c0_89 = arith.constant 0 : index
    %c0_90 = arith.constant 0 : index
    %160 = vector.load %arg22[%c0_88, %c0_89, %c0_90] : memref<1x8x32xf32, #tpu.memory_space<vmem>>, vector<1x8x32xf32>
    %161 = vector.shape_cast %160 : vector<1x8x32xf32> to vector<8x32xf32>
    %162 = vector.shape_cast %158 : vector<8x32xf32> to vector<1x8x32xf32>
    tpu.vector_store %arg22[%c0_88, %c0_89, %c0_90], %162 {strides = array<i32>} : memref<1x8x32xf32, #tpu.memory_space<vmem>>, vector<1x8x32xf32>,
    return
  }
  func.func @transform_0(%arg0: i32, %arg1: i32) -> (i32, i32, i32) {
    %c0_i32 = arith.constant 0 : i32
    %c0_i32_0 = arith.constant 0 : i32
    %c0_i32_1 = arith.constant 0 : i32
    return %arg0, %c0_i32, %c0_i32_0 : i32, i32, i32
  }
  func.func @transform_1(%arg0: i32, %arg1: i32) -> (i32, i32, i32) {
    %c0_i32 = arith.constant 0 : i32
    %c0_i32_0 = arith.constant 0 : i32
    %c0_i32_1 = arith.constant 0 : i32
    return %arg0, %c0_i32, %c0_i32_0 : i32, i32, i32
  }
  func.func @transform_2(%arg0: i32, %arg1: i32) -> (i32, i32, i32) {
    %c0_i32 = arith.constant 0 : i32
    %c0_i32_0 = arith.constant 0 : i32
    %c0_i32_1 = arith.constant 0 : i32
    return %arg1, %c0_i32, %c0_i32_0 : i32, i32, i32
  }
  func.func @transform_3(%arg0: i32, %arg1: i32) -> (i32, i32, i32) {
    %c0_i32 = arith.constant 0 : i32
    %c0_i32_0 = arith.constant 0 : i32
    %c0_i32_1 = arith.constant 0 : i32
    return %arg1, %c0_i32, %c0_i32_0 : i32, i32, i32
  }
  func.func @transform_4(%arg0: i32, %arg1: i32) -> (i32, i32, i32) {
    %c0_i32 = arith.constant 0 : i32
    %c0_i32_0 = arith.constant 0 : i32
    %c0_i32_1 = arith.constant 0 : i32
    return %arg1, %c0_i32, %c0_i32_0 : i32, i32, i32
  }
  func.func @transform_5(%arg0: i32, %arg1: i32) -> (i32, i32, i32) {
    %c0_i32 = arith.constant 0 : i32
    %c0_i32_0 = arith.constant 0 : i32
    %c0_i32_1 = arith.constant 0 : i32
    return %arg1, %c0_i32, %c0_i32_0 : i32, i32, i32
  }
  func.func @transform_6(%arg0: i32, %arg1: i32) -> (i32, i32, i32) {
    %c0_i32 = arith.constant 0 : i32
    %c0_i32_0 = arith.constant 0 : i32
    %c0_i32_1 = arith.constant 0 : i32
    return %arg1, %c0_i32, %c0_i32_0 : i32, i32, i32
  }
  func.func @transform_7(%arg0: i32, %arg1: i32) -> (i32, i32, i32) {
    %c0_i32 = arith.constant 0 : i32
    %c0_i32_0 = arith.constant 0 : i32
    %c0_i32_1 = arith.constant 0 : i32
    return %arg1, %c0_i32, %c0_i32_0 : i32, i32, i32
  }
  func.func @transform_8(%arg0: i32, %arg1: i32) -> (i32, i32, i32) {
    %c0_i32 = arith.constant 0 : i32
    %c0_i32_0 = arith.constant 0 : i32
    %c0_i32_1 = arith.constant 0 : i32
    return %arg1, %c0_i32, %c0_i32_0 : i32, i32, i32
  }
  func.func @transform_9(%arg0: i32, %arg1: i32) -> (i32, i32, i32) {
    %c0_i32 = arith.constant 0 : i32
    %c0_i32_0 = arith.constant 0 : i32
    %c0_i32_1 = arith.constant 0 : i32
    return %arg1, %c0_i32, %c0_i32_0 : i32, i32, i32
  }
  func.func @transform_10(%arg0: i32, %arg1: i32) -> (i32, i32, i32) {
    %c0_i32 = arith.constant 0 : i32
    %c0_i32_0 = arith.constant 0 : i32
    %c0_i32_1 = arith.constant 0 : i32
    return %arg1, %c0_i32, %c0_i32_0 : i32, i32, i32
  }
  func.func @transform_11(%arg0: i32, %arg1: i32) -> (i32, i32, i32) {
    %c0_i32 = arith.constant 0 : i32
    %c0_i32_0 = arith.constant 0 : i32
    %c0_i32_1 = arith.constant 0 : i32
    return %arg1, %c0_i32, %c0_i32_0 : i32, i32, i32
  }
  func.func @transform_12(%arg0: i32, %arg1: i32) -> (i32, i32, i32) {
    %c0_i32 = arith.constant 0 : i32
    %c0_i32_0 = arith.constant 0 : i32
    %c0_i32_1 = arith.constant 0 : i32
    return %arg1, %c0_i32, %c0_i32_0 : i32, i32, i32
  }
  func.func @transform_13(%arg0: i32, %arg1: i32) -> (i32, i32, i32) {
    %c0_i32 = arith.constant 0 : i32
    %c0_i32_0 = arith.constant 0 : i32
    %c0_i32_1 = arith.constant 0 : i32
    return %arg1, %c0_i32, %c0_i32_0 : i32, i32, i32
  }
  func.func @transform_14(%arg0: i32, %arg1: i32) -> (i32, i32, i32) {
    %c0_i32 = arith.constant 0 : i32
    %c0_i32_0 = arith.constant 0 : i32
    %c0_i32_1 = arith.constant 0 : i32
    return %arg1, %c0_i32, %c0_i32_0 : i32, i32, i32
  }
  func.func @transform_15(%arg0: i32, %arg1: i32) -> (i32, i32, i32) {
    %c0_i32 = arith.constant 0 : i32
    %c0_i32_0 = arith.constant 0 : i32
    %c0_i32_1 = arith.constant 0 : i32
    return %arg1, %c0_i32, %c0_i32_0 : i32, i32, i32
  }
  func.func @transform_16(%arg0: i32, %arg1: i32) -> (i32, i32, i32) {
    %c0_i32 = arith.constant 0 : i32
    %c0_i32_0 = arith.constant 0 : i32
    %c0_i32_1 = arith.constant 0 : i32
    return %arg1, %c0_i32, %c0_i32_0 : i32, i32, i32
  }
  func.func @transform_17(%arg0: i32, %arg1: i32) -> (i32, i32, i32) {
    %c0_i32 = arith.constant 0 : i32
    %c0_i32_0 = arith.constant 0 : i32
    %c0_i32_1 = arith.constant 0 : i32
    return %arg1, %c0_i32, %c0_i32_0 : i32, i32, i32
  }
  func.func @transform_18(%arg0: i32, %arg1: i32) -> (i32, i32, i32) {
    %c0_i32 = arith.constant 0 : i32
    %c0_i32_0 = arith.constant 0 : i32
    %c0_i32_1 = arith.constant 0 : i32
    return %arg1, %c0_i32, %c0_i32_0 : i32, i32, i32
  }
  func.func @transform_19(%arg0: i32, %arg1: i32) -> (i32, i32, i32) {
    %c0_i32 = arith.constant 0 : i32
    %c0_i32_0 = arith.constant 0 : i32
    %c0_i32_1 = arith.constant 0 : i32
    return %arg1, %c0_i32, %c0_i32_0 : i32, i32, i32
  }
  func.func @transform_20(%arg0: i32, %arg1: i32) -> (i32, i32, i32) {
    %c0_i32 = arith.constant 0 : i32
    %c0_i32_0 = arith.constant 0 : i32
    %c0_i32_1 = arith.constant 0 : i32
    return %arg0, %c0_i32, %c0_i32_0 : i32, i32, i32
  }
}

</mosaic_0001>

<llo_original>
// kernel: encoder_forward.1
$region0: #{encoder_forward.1}
  #allocation0 [shape = 'u32[]', space=smem, size = 0x4, offset = 0x4, fixed_abs, tag = 'smem constant byte address 0x4 - core index']
  #allocation1 [shape = 'u32[144,128]{1,0:T(1,128)}', space=vmem, size = 0x12000, scoped, tag = 'internal scratch']
  #allocation2 [shape = 'f32[8,32]{1,0:T(8,128)}', space=vmem, size = 0x1000, scoped, tag = 'scratch operand']
  %s0 = inlined_call_operand.vmem [shape: f32[2,8,32], index: 0, kind: input, shape index: {}]
  %s1 = inlined_call_operand.vmem [shape: s32[2,1,8], index: 1, kind: input, shape index: {}]
  %s2 = inlined_call_operand.vmem [shape: f32[2,32,96], index: 2, kind: input, shape index: {}]
  %s3 = inlined_call_operand.vmem [shape: f32[2,1,96], index: 3, kind: input, shape index: {}]
  %s4 = inlined_call_operand.vmem [shape: f32[2,32,32], index: 4, kind: input, shape index: {}]
  %s5 = inlined_call_operand.vmem [shape: f32[2,1,32], index: 5, kind: input, shape index: {}]
  %s6 = inlined_call_operand.vmem [shape: f32[2,32,32], index: 6, kind: input, shape index: {}]
  %s7 = inlined_call_operand.vmem [shape: f32[2,32,32], index: 7, kind: input, shape index: {}]
  %s8 = inlined_call_operand.vmem [shape: f32[2,1,32], index: 8, kind: input, shape index: {}]
  %s9 = inlined_call_operand.vmem [shape: f32[2,32,32], index: 9, kind: input, shape index: {}]
  %s10 = inlined_call_operand.vmem [shape: f32[2,32,32], index: 10, kind: input, shape index: {}]
  %s11 = inlined_call_operand.vmem [shape: f32[2,1,32], index: 11, kind: input, shape index: {}]
  %s12 = inlined_call_operand.vmem [shape: f32[2,1,32], index: 12, kind: input, shape index: {}]
  %s13 = inlined_call_operand.vmem [shape: f32[2,1,32], index: 13, kind: input, shape index: {}]
  %s14 = inlined_call_operand.vmem [shape: f32[2,32,64], index: 14, kind: input, shape index: {}]
  %s15 = inlined_call_operand.vmem [shape: f32[2,1,64], index: 15, kind: input, shape index: {}]
  %s16 = inlined_call_operand.vmem [shape: f32[2,64,32], index: 16, kind: input, shape index: {}]
  %s17 = inlined_call_operand.vmem [shape: f32[2,1,32], index: 17, kind: input, shape index: {}]
  %s18 = inlined_call_operand.vmem [shape: f32[2,1,32], index: 18, kind: input, shape index: {}]
  %s19 = inlined_call_operand.vmem [shape: f32[2,1,32], index: 19, kind: input, shape index: {}]
  %s20 = inlined_call_operand.hbm [shape: f32[2,8,32], index: 20, kind: output, shape index: {}]
  %s21 = sld [smem:[#allocation0]]
  $region117: #{encoder_forward.1} parent=0
    _
  %s23 = ssub.s32 1, %s21
  %s24 = scalar_select 0, %s23, %s21
  $region1: #{encoder_forward.1} parent=0
    #allocation3 [shape = 'u8[8192]{0}', space=vmem, size = 0x2000, scoped, tag = 'output window, operand 0']
    #allocation4 [shape = 's32[2]{0}', space=sflag, size = 0x8, scoped, tag = 'scoped memory for encoder_forward.1']
    %25 = vsyncpa [#allocation4], 0
    %s26 = scalar_lea.sflag [#allocation4], 1
    %27 = vsyncpa %s26, 0
    loop: start=0, step=1, limit=6
    $region2: #{encoder_forward.1} parent=1 // loop_pre_header
      _
    $region3: #{encoder_forward.1} parent=1 // loop_header
      %s29 = sphi 0, %s33
      %p30 = scmp.ge.s32.totalorder %s29, 6
      %s36 = sphi 0, %s48
      %s37 = sphi 0, %s44
      %s38 = sphi 0, %s36
      %s39 = sphi 0, %s37
      %s40 = sphi 0, %s38
      %s41 = sphi 0, %s39
      %s51 = sphi 0, %s53
      %s54 = sphi 0, %s51
      %s55 = sphi 0, %s54
      %s71 = sphi 0, %s55
      %s77 = sphi 0, %s79
      %s80 = sphi 0, %s77
      %s81 = sphi 0, %s80
      %s97 = sphi 0, %s81
      %s103 = sphi 0, %s105
      %s106 = sphi 0, %s103
      %s107 = sphi 0, %s106
      %s123 = sphi 0, %s107
      %s129 = sphi 0, %s131
      %s132 = sphi 0, %s129
      %s133 = sphi 0, %s132
      %s149 = sphi 0, %s133
      %s155 = sphi 0, %s157
      %s158 = sphi 0, %s155
      %s159 = sphi 0, %s158
      %s175 = sphi 0, %s159
      %s181 = sphi 0, %s183
      %s184 = sphi 0, %s181
      %s185 = sphi 0, %s184
      %s201 = sphi 0, %s185
      %s207 = sphi 0, %s209
      %s210 = sphi 0, %s207
      %s211 = sphi 0, %s210
      %s227 = sphi 0, %s211
      %s233 = sphi 0, %s235
      %s236 = sphi 0, %s233
      %s237 = sphi 0, %s236
      %s253 = sphi 0, %s237
      %s259 = sphi 0, %s261
      %s262 = sphi 0, %s259
      %s263 = sphi 0, %s262
      %s279 = sphi 0, %s263
      %s285 = sphi 0, %s287
      %s288 = sphi 0, %s285
      %s289 = sphi 0, %s288
      %s305 = sphi 0, %s289
      %s311 = sphi 0, %s313
      %s314 = sphi 0, %s311
      %s315 = sphi 0, %s314
      %s331 = sphi 0, %s315
      %s337 = sphi 0, %s339
      %s340 = sphi 0, %s337
      %s341 = sphi 0, %s340
      %s357 = sphi 0, %s341
      %s363 = sphi 0, %s365
      %s366 = sphi 0, %s363
      %s367 = sphi 0, %s366
      %s383 = sphi 0, %s367
      %s389 = sphi 0, %s391
      %s392 = sphi 0, %s389
      %s393 = sphi 0, %s392
      %s409 = sphi 0, %s393
      %s415 = sphi 0, %s417
      %s418 = sphi 0, %s415
      %s419 = sphi 0, %s418
      %s435 = sphi 0, %s419
      %s441 = sphi 0, %s443
      %s444 = sphi 0, %s441
      %s445 = sphi 0, %s444
      %s461 = sphi 0, %s445
      %s467 = sphi 0, %s469
      %s470 = sphi 0, %s467
      %s471 = sphi 0, %s470
      %s487 = sphi 0, %s471
      %s493 = sphi 0, %s495
      %s496 = sphi 0, %s493
      %s497 = sphi 0, %s496
      %s513 = sphi 0, %s497
      %s519 = sphi 0, %s521
      %s522 = sphi 0, %s519
      %s523 = sphi 0, %s522
      %s539 = sphi 0, %s523
      %s545 = sphi 0, %s547
      %s548 = sphi 0, %s545
      %s549 = sphi 0, %s548
      %s565 = sphi 0, %s549
      %s571 = sphi 0, %s573
      %s574 = sphi 0, %s571
      %s575 = sphi 0, %s574
      %s591 = sphi 0, %s575
    $region4: #{encoder_forward.1} parent=1 // loop_header_branch
      %32 = sbr.rel (%p30) target = $region8
    $region5: #{encoder_forward.1} parent=1 // loop_body
      %s34 = ssub.s32 %s29, 1
      %s35 = ssub.s32 %s29, 2
      %s42 = sadd.s32 1, %s37
      %p43 = scmp.ge.s32.totalorder %s42, 2
      %s44 = scalar_select %p43, 0, %s42
      %s45 = sadd.s32 1, %s36
      %s46 = scalar_select %p43, %s45, %s36
      %p47 = scmp.ge.s32.totalorder %s46, 2
      %s48 = scalar_select %p47, 0, %s46
      %s49 = ssub.s32 %s36, %s48
      %p50 = scmp.eq.s32.totalorder %s49, 0
      %s52 = sadd.s32 %s51, 1
      %s53 = scalar_select %p50, %s51, %s52
      %p56 = pneg %p50
      %p57 = scmp.eq.s32.totalorder %s29, 3
      %p58 = por %p56, %p57
      %p59 = scmp.ne.s32.totalorder %s51, %s54
      %p60 = scmp.eq.s32.totalorder %s29, 0
      %p61 = por %p59, %p60
      %p62 = scmp.ne.s32.totalorder %s51, %s54
      %p63 = scmp.eq.s32.totalorder %s34, 3
      %p64 = por %p62, %p63
      %p65 = scmp.ne.s32.totalorder %s54, %s55
      %p66 = scmp.eq.s32.totalorder %s34, 0
      %p67 = por %p65, %p66
      %p68 = scmp.ne.s32.totalorder %s54, %s55
      %p69 = scmp.eq.s32.totalorder %s35, 3
      %p70 = por %p68, %p69
      %p72 = scmp.ne.s32.totalorder %s55, %s71
      %p73 = scmp.eq.s32.totalorder %s35, 0
      %p74 = por %p72, %p73
      %s75 = ssub.s32 %s36, %s48
      %p76 = scmp.eq.s32.totalorder %s75, 0
      %s78 = sadd.s32 %s77, 1
      %s79 = scalar_select %p76, %s77, %s78
      %p82 = pneg %p76
      %p83 = scmp.eq.s32.totalorder %s29, 3
      %p84 = por %p82, %p83
      %p85 = scmp.ne.s32.totalorder %s77, %s80
      %p86 = scmp.eq.s32.totalorder %s29, 0
      %p87 = por %p85, %p86
      %p88 = scmp.ne.s32.totalorder %s77, %s80
      %p89 = scmp.eq.s32.totalorder %s34, 3
      %p90 = por %p88, %p89
      %p91 = scmp.ne.s32.totalorder %s80, %s81
      %p92 = scmp.eq.s32.totalorder %s34, 0
      %p93 = por %p91, %p92
      %p94 = scmp.ne.s32.totalorder %s80, %s81
      %p95 = scmp.eq.s32.totalorder %s35, 3
      %p96 = por %p94, %p95
      %p98 = scmp.ne.s32.totalorder %s81, %s97
      %p99 = scmp.eq.s32.totalorder %s35, 0
      %p100 = por %p98, %p99
      %s101 = ssub.s32 %s37, %s44
      %p102 = scmp.eq.s32.totalorder %s101, 0
      %s104 = sadd.s32 %s103, 1
      %s105 = scalar_select %p102, %s103, %s104
      %p108 = pneg %p102
      %p109 = scmp.eq.s32.totalorder %s29, 3
      %p110 = por %p108, %p109
      %p111 = scmp.ne.s32.totalorder %s103, %s106
      %p112 = scmp.eq.s32.totalorder %s29, 0
      %p113 = por %p111, %p112
      %p114 = scmp.ne.s32.totalorder %s103, %s106
      %p115 = scmp.eq.s32.totalorder %s34, 3
      %p116 = por %p114, %p115
      %p117 = scmp.ne.s32.totalorder %s106, %s107
      %p118 = scmp.eq.s32.totalorder %s34, 0
      %p119 = por %p117, %p118
      %p120 = scmp.ne.s32.totalorder %s106, %s107
      %p121 = scmp.eq.s32.totalorder %s35, 3
      %p122 = por %p120, %p121
      %p124 = scmp.ne.s32.totalorder %s107, %s123
      %p125 = scmp.eq.s32.totalorder %s35, 0
      %p126 = por %p124, %p125
      %s127 = ssub.s32 %s37, %s44
      %p128 = scmp.eq.s32.totalorder %s127, 0
      %s130 = sadd.s32 %s129, 1
      %s131 = scalar_select %p128, %s129, %s130
      %p134 = pneg %p128
      %p135 = scmp.eq.s32.totalorder %s29, 3
      %p136 = por %p134, %p135
      %p137 = scmp.ne.s32.totalorder %s129, %s132
      %p138 = scmp.eq.s32.totalorder %s29, 0
      %p139 = por %p137, %p138
      %p140 = scmp.ne.s32.totalorder %s129, %s132
      %p141 = scmp.eq.s32.totalorder %s34, 3
      %p142 = por %p140, %p141
      %p143 = scmp.ne.s32.totalorder %s132, %s133
      %p144 = scmp.eq.s32.totalorder %s34, 0
      %p145 = por %p143, %p144
      %p146 = scmp.ne.s32.totalorder %s132, %s133
      %p147 = scmp.eq.s32.totalorder %s35, 3
      %p148 = por %p146, %p147
      %p150 = scmp.ne.s32.totalorder %s133, %s149
      %p151 = scmp.eq.s32.totalorder %s35, 0
      %p152 = por %p150, %p151
      %s153 = ssub.s32 %s37, %s44
      %p154 = scmp.eq.s32.totalorder %s153, 0
      %s156 = sadd.s32 %s155, 1
      %s157 = scalar_select %p154, %s155, %s156
      %p160 = pneg %p154
      %p161 = scmp.eq.s32.totalorder %s29, 3
      %p162 = por %p160, %p161
      %p163 = scmp.ne.s32.totalorder %s155, %s158
      %p164 = scmp.eq.s32.totalorder %s29, 0
      %p165 = por %p163, %p164
      %p166 = scmp.ne.s32.totalorder %s155, %s158
      %p167 = scmp.eq.s32.totalorder %s34, 3
      %p168 = por %p166, %p167
      %p169 = scmp.ne.s32.totalorder %s158, %s159
      %p170 = scmp.eq.s32.totalorder %s34, 0
      %p171 = por %p169, %p170
      %p172 = scmp.ne.s32.totalorder %s158, %s159
      %p173 = scmp.eq.s32.totalorder %s35, 3
      %p174 = por %p172, %p173
      %p176 = scmp.ne.s32.totalorder %s159, %s175
      %p177 = scmp.eq.s32.totalorder %s35, 0
      %p178 = por %p176, %p177
      %s179 = ssub.s32 %s37, %s44
      %p180 = scmp.eq.s32.totalorder %s179, 0
      %s182 = sadd.s32 %s181, 1
      %s183 = scalar_select %p180, %s181, %s182
      %p186 = pneg %p180
      %p187 = scmp.eq.s32.totalorder %s29, 3
      %p188 = por %p186, %p187
      %p189 = scmp.ne.s32.totalorder %s181, %s184
      %p190 = scmp.eq.s32.totalorder %s29, 0
      %p191 = por %p189, %p190
      %p192 = scmp.ne.s32.totalorder %s181, %s184
      %p193 = scmp.eq.s32.totalorder %s34, 3
      %p194 = por %p192, %p193
      %p195 = scmp.ne.s32.totalorder %s184, %s185
      %p196 = scmp.eq.s32.totalorder %s34, 0
      %p197 = por %p195, %p196
      %p198 = scmp.ne.s32.totalorder %s184, %s185
      %p199 = scmp.eq.s32.totalorder %s35, 3
      %p200 = por %p198, %p199
      %p202 = scmp.ne.s32.totalorder %s185, %s201
      %p203 = scmp.eq.s32.totalorder %s35, 0
      %p204 = por %p202, %p203
      %s205 = ssub.s32 %s37, %s44
      %p206 = scmp.eq.s32.totalorder %s205, 0
      %s208 = sadd.s32 %s207, 1
      %s209 = scalar_select %p206, %s207, %s208
      %p212 = pneg %p206
      %p213 = scmp.eq.s32.totalorder %s29, 3
      %p214 = por %p212, %p213
      %p215 = scmp.ne.s32.totalorder %s207, %s210
      %p216 = scmp.eq.s32.totalorder %s29, 0
      %p217 = por %p215, %p216
      %p218 = scmp.ne.s32.totalorder %s207, %s210
      %p219 = scmp.eq.s32.totalorder %s34, 3
      %p220 = por %p218, %p219
      %p221 = scmp.ne.s32.totalorder %s210, %s211
      %p222 = scmp.eq.s32.totalorder %s34, 0
      %p223 = por %p221, %p222
      %p224 = scmp.ne.s32.totalorder %s210, %s211
      %p225 = scmp.eq.s32.totalorder %s35, 3
      %p226 = por %p224, %p225
      %p228 = scmp.ne.s32.totalorder %s211, %s227
      %p229 = scmp.eq.s32.totalorder %s35, 0
      %p230 = por %p228, %p229
      %s231 = ssub.s32 %s37, %s44
      %p232 = scmp.eq.s32.totalorder %s231, 0
      %s234 = sadd.s32 %s233, 1
      %s235 = scalar_select %p232, %s233, %s234
      %p238 = pneg %p232
      %p239 = scmp.eq.s32.totalorder %s29, 3
      %p240 = por %p238, %p239
      %p241 = scmp.ne.s32.totalorder %s233, %s236
      %p242 = scmp.eq.s32.totalorder %s29, 0
      %p243 = por %p241, %p242
      %p244 = scmp.ne.s32.totalorder %s233, %s236
      %p245 = scmp.eq.s32.totalorder %s34, 3
      %p246 = por %p244, %p245
      %p247 = scmp.ne.s32.totalorder %s236, %s237
      %p248 = scmp.eq.s32.totalorder %s34, 0
      %p249 = por %p247, %p248
      %p250 = scmp.ne.s32.totalorder %s236, %s237
      %p251 = scmp.eq.s32.totalorder %s35, 3
      %p252 = por %p250, %p251
      %p254 = scmp.ne.s32.totalorder %s237, %s253
      %p255 = scmp.eq.s32.totalorder %s35, 0
      %p256 = por %p254, %p255
      %s257 = ssub.s32 %s37, %s44
      %p258 = scmp.eq.s32.totalorder %s257, 0
      %s260 = sadd.s32 %s259, 1
      %s261 = scalar_select %p258, %s259, %s260
      %p264 = pneg %p258
      %p265 = scmp.eq.s32.totalorder %s29, 3
      %p266 = por %p264, %p265
      %p267 = scmp.ne.s32.totalorder %s259, %s262
      %p268 = scmp.eq.s32.totalorder %s29, 0
      %p269 = por %p267, %p268
      %p270 = scmp.ne.s32.totalorder %s259, %s262
      %p271 = scmp.eq.s32.totalorder %s34, 3
      %p272 = por %p270, %p271
      %p273 = scmp.ne.s32.totalorder %s262, %s263
      %p274 = scmp.eq.s32.totalorder %s34, 0
      %p275 = por %p273, %p274
      %p276 = scmp.ne.s32.totalorder %s262, %s263
      %p277 = scmp.eq.s32.totalorder %s35, 3
      %p278 = por %p276, %p277
      %p280 = scmp.ne.s32.totalorder %s263, %s279
      %p281 = scmp.eq.s32.totalorder %s35, 0
      %p282 = por %p280, %p281
      %s283 = ssub.s32 %s37, %s44
      %p284 = scmp.eq.s32.totalorder %s283, 0
      %s286 = sadd.s32 %s285, 1
      %s287 = scalar_select %p284, %s285, %s286
      %p290 = pneg %p284
      %p291 = scmp.eq.s32.totalorder %s29, 3
      %p292 = por %p290, %p291
      %p293 = scmp.ne.s32.totalorder %s285, %s288
      %p294 = scmp.eq.s32.totalorder %s29, 0
      %p295 = por %p293, %p294
      %p296 = scmp.ne.s32.totalorder %s285, %s288
      %p297 = scmp.eq.s32.totalorder %s34, 3
      %p298 = por %p296, %p297
      %p299 = scmp.ne.s32.totalorder %s288, %s289
      %p300 = scmp.eq.s32.totalorder %s34, 0
      %p301 = por %p299, %p300
      %p302 = scmp.ne.s32.totalorder %s288, %s289
      %p303 = scmp.eq.s32.totalorder %s35, 3
      %p304 = por %p302, %p303
      %p306 = scmp.ne.s32.totalorder %s289, %s305
      %p307 = scmp.eq.s32.totalorder %s35, 0
      %p308 = por %p306, %p307
      %s309 = ssub.s32 %s37, %s44
      %p310 = scmp.eq.s32.totalorder %s309, 0
      %s312 = sadd.s32 %s311, 1
      %s313 = scalar_select %p310, %s311, %s312
      %p316 = pneg %p310
      %p317 = scmp.eq.s32.totalorder %s29, 3
      %p318 = por %p316, %p317
      %p319 = scmp.ne.s32.totalorder %s311, %s314
      %p320 = scmp.eq.s32.totalorder %s29, 0
      %p321 = por %p319, %p320
      %p322 = scmp.ne.s32.totalorder %s311, %s314
      %p323 = scmp.eq.s32.totalorder %s34, 3
      %p324 = por %p322, %p323
      %p325 = scmp.ne.s32.totalorder %s314, %s315
      %p326 = scmp.eq.s32.totalorder %s34, 0
      %p327 = por %p325, %p326
      %p328 = scmp.ne.s32.totalorder %s314, %s315
      %p329 = scmp.eq.s32.totalorder %s35, 3
      %p330 = por %p328, %p329
      %p332 = scmp.ne.s32.totalorder %s315, %s331
      %p333 = scmp.eq.s32.totalorder %s35, 0
      %p334 = por %p332, %p333
      %s335 = ssub.s32 %s37, %s44
      %p336 = scmp.eq.s32.totalorder %s335, 0
      %s338 = sadd.s32 %s337, 1
      %s339 = scalar_select %p336, %s337, %s338
      %p342 = pneg %p336
      %p343 = scmp.eq.s32.totalorder %s29, 3
      %p344 = por %p342, %p343
      %p345 = scmp.ne.s32.totalorder %s337, %s340
      %p346 = scmp.eq.s32.totalorder %s29, 0
      %p347 = por %p345, %p346
      %p348 = scmp.ne.s32.totalorder %s337, %s340
      %p349 = scmp.eq.s32.totalorder %s34, 3
      %p350 = por %p348, %p349
      %p351 = scmp.ne.s32.totalorder %s340, %s341
      %p352 = scmp.eq.s32.totalorder %s34, 0
      %p353 = por %p351, %p352
      %p354 = scmp.ne.s32.totalorder %s340, %s341
      %p355 = scmp.eq.s32.totalorder %s35, 3
      %p356 = por %p354, %p355
      %p358 = scmp.ne.s32.totalorder %s341, %s357
      %p359 = scmp.eq.s32.totalorder %s35, 0
      %p360 = por %p358, %p359
      %s361 = ssub.s32 %s37, %s44
      %p362 = scmp.eq.s32.totalorder %s361, 0
      %s364 = sadd.s32 %s363, 1
      %s365 = scalar_select %p362, %s363, %s364
      %p368 = pneg %p362
      %p369 = scmp.eq.s32.totalorder %s29, 3
      %p370 = por %p368, %p369
      %p371 = scmp.ne.s32.totalorder %s363, %s366
      %p372 = scmp.eq.s32.totalorder %s29, 0
      %p373 = por %p371, %p372
      %p374 = scmp.ne.s32.totalorder %s363, %s366
      %p375 = scmp.eq.s32.totalorder %s34, 3
      %p376 = por %p374, %p375
      %p377 = scmp.ne.s32.totalorder %s366, %s367
      %p378 = scmp.eq.s32.totalorder %s34, 0
      %p379 = por %p377, %p378
      %p380 = scmp.ne.s32.totalorder %s366, %s367
      %p381 = scmp.eq.s32.totalorder %s35, 3
      %p382 = por %p380, %p381
      %p384 = scmp.ne.s32.totalorder %s367, %s383
      %p385 = scmp.eq.s32.totalorder %s35, 0
      %p386 = por %p384, %p385
      %s387 = ssub.s32 %s37, %s44
      %p388 = scmp.eq.s32.totalorder %s387, 0
      %s390 = sadd.s32 %s389, 1
      %s391 = scalar_select %p388, %s389, %s390
      %p394 = pneg %p388
      %p395 = scmp.eq.s32.totalorder %s29, 3
      %p396 = por %p394, %p395
      %p397 = scmp.ne.s32.totalorder %s389, %s392
      %p398 = scmp.eq.s32.totalorder %s29, 0
      %p399 = por %p397, %p398
      %p400 = scmp.ne.s32.totalorder %s389, %s392
      %p401 = scmp.eq.s32.totalorder %s34, 3
      %p402 = por %p400, %p401
      %p403 = scmp.ne.s32.totalorder %s392, %s393
      %p404 = scmp.eq.s32.totalorder %s34, 0
      %p405 = por %p403, %p404
      %p406 = scmp.ne.s32.totalorder %s392, %s393
      %p407 = scmp.eq.s32.totalorder %s35, 3
      %p408 = por %p406, %p407
      %p410 = scmp.ne.s32.totalorder %s393, %s409
      %p411 = scmp.eq.s32.totalorder %s35, 0
      %p412 = por %p410, %p411
      %s413 = ssub.s32 %s37, %s44
      %p414 = scmp.eq.s32.totalorder %s413, 0
      %s416 = sadd.s32 %s415, 1
      %s417 = scalar_select %p414, %s415, %s416
      %p420 = pneg %p414
      %p421 = scmp.eq.s32.totalorder %s29, 3
      %p422 = por %p420, %p421
      %p423 = scmp.ne.s32.totalorder %s415, %s418
      %p424 = scmp.eq.s32.totalorder %s29, 0
      %p425 = por %p423, %p424
      %p426 = scmp.ne.s32.totalorder %s415, %s418
      %p427 = scmp.eq.s32.totalorder %s34, 3
      %p428 = por %p426, %p427
      %p429 = scmp.ne.s32.totalorder %s418, %s419
      %p430 = scmp.eq.s32.totalorder %s34, 0
      %p431 = por %p429, %p430
      %p432 = scmp.ne.s32.totalorder %s418, %s419
      %p433 = scmp.eq.s32.totalorder %s35, 3
      %p434 = por %p432, %p433
      %p436 = scmp.ne.s32.totalorder %s419, %s435
      %p437 = scmp.eq.s32.totalorder %s35, 0
      %p438 = por %p436, %p437
      %s439 = ssub.s32 %s37, %s44
      %p440 = scmp.eq.s32.totalorder %s439, 0
      %s442 = sadd.s32 %s441, 1
      %s443 = scalar_select %p440, %s441, %s442
      %p446 = pneg %p440
      %p447 = scmp.eq.s32.totalorder %s29, 3
      %p448 = por %p446, %p447
      %p449 = scmp.ne.s32.totalorder %s441, %s444
      %p450 = scmp.eq.s32.totalorder %s29, 0
      %p451 = por %p449, %p450
      %p452 = scmp.ne.s32.totalorder %s441, %s444
      %p453 = scmp.eq.s32.totalorder %s34, 3
      %p454 = por %p452, %p453
      %p455 = scmp.ne.s32.totalorder %s444, %s445
      %p456 = scmp.eq.s32.totalorder %s34, 0
      %p457 = por %p455, %p456
      %p458 = scmp.ne.s32.totalorder %s444, %s445
      %p459 = scmp.eq.s32.totalorder %s35, 3
      %p460 = por %p458, %p459
      %p462 = scmp.ne.s32.totalorder %s445, %s461
      %p463 = scmp.eq.s32.totalorder %s35, 0
      %p464 = por %p462, %p463
      %s465 = ssub.s32 %s37, %s44
      %p466 = scmp.eq.s32.totalorder %s465, 0
      %s468 = sadd.s32 %s467, 1
      %s469 = scalar_select %p466, %s467, %s468
      %p472 = pneg %p466
      %p473 = scmp.eq.s32.totalorder %s29, 3
      %p474 = por %p472, %p473
      %p475 = scmp.ne.s32.totalorder %s467, %s470
      %p476 = scmp.eq.s32.totalorder %s29, 0
      %p477 = por %p475, %p476
      %p478 = scmp.ne.s32.totalorder %s467, %s470
      %p479 = scmp.eq.s32.totalorder %s34, 3
      %p480 = por %p478, %p479
      %p481 = scmp.ne.s32.totalorder %s470, %s471
      %p482 = scmp.eq.s32.totalorder %s34, 0
      %p483 = por %p481, %p482
      %p484 = scmp.ne.s32.totalorder %s470, %s471
      %p485 = scmp.eq.s32.totalorder %s35, 3
      %p486 = por %p484, %p485
      %p488 = scmp.ne.s32.totalorder %s471, %s487
      %p489 = scmp.eq.s32.totalorder %s35, 0
      %p490 = por %p488, %p489
      %s491 = ssub.s32 %s37, %s44
      %p492 = scmp.eq.s32.totalorder %s491, 0
      %s494 = sadd.s32 %s493, 1
      %s495 = scalar_select %p492, %s493, %s494
      %p498 = pneg %p492
      %p499 = scmp.eq.s32.totalorder %s29, 3
      %p500 = por %p498, %p499
      %p501 = scmp.ne.s32.totalorder %s493, %s496
      %p502 = scmp.eq.s32.totalorder %s29, 0
      %p503 = por %p501, %p502
      %p504 = scmp.ne.s32.totalorder %s493, %s496
      %p505 = scmp.eq.s32.totalorder %s34, 3
      %p506 = por %p504, %p505
      %p507 = scmp.ne.s32.totalorder %s496, %s497
      %p508 = scmp.eq.s32.totalorder %s34, 0
      %p509 = por %p507, %p508
      %p510 = scmp.ne.s32.totalorder %s496, %s497
      %p511 = scmp.eq.s32.totalorder %s35, 3
      %p512 = por %p510, %p511
      %p514 = scmp.ne.s32.totalorder %s497, %s513
      %p515 = scmp.eq.s32.totalorder %s35, 0
      %p516 = por %p514, %p515
      %s517 = ssub.s32 %s37, %s44
      %p518 = scmp.eq.s32.totalorder %s517, 0
      %s520 = sadd.s32 %s519, 1
      %s521 = scalar_select %p518, %s519, %s520
      %p524 = pneg %p518
      %p525 = scmp.eq.s32.totalorder %s29, 3
      %p526 = por %p524, %p525
      %p527 = scmp.ne.s32.totalorder %s519, %s522
      %p528 = scmp.eq.s32.totalorder %s29, 0
      %p529 = por %p527, %p528
      %p530 = scmp.ne.s32.totalorder %s519, %s522
      %p531 = scmp.eq.s32.totalorder %s34, 3
      %p532 = por %p530, %p531
      %p533 = scmp.ne.s32.totalorder %s522, %s523
      %p534 = scmp.eq.s32.totalorder %s34, 0
      %p535 = por %p533, %p534
      %p536 = scmp.ne.s32.totalorder %s522, %s523
      %p537 = scmp.eq.s32.totalorder %s35, 3
      %p538 = por %p536, %p537
      %p540 = scmp.ne.s32.totalorder %s523, %s539
      %p541 = scmp.eq.s32.totalorder %s35, 0
      %p542 = por %p540, %p541
      %s543 = ssub.s32 %s37, %s44
      %p544 = scmp.eq.s32.totalorder %s543, 0
      %s546 = sadd.s32 %s545, 1
      %s547 = scalar_select %p544, %s545, %s546
      %p550 = pneg %p544
      %p551 = scmp.eq.s32.totalorder %s29, 3
      %p552 = por %p550, %p551
      %p553 = scmp.ne.s32.totalorder %s545, %s548
      %p554 = scmp.eq.s32.totalorder %s29, 0
      %p555 = por %p553, %p554
      %p556 = scmp.ne.s32.totalorder %s545, %s548
      %p557 = scmp.eq.s32.totalorder %s34, 3
      %p558 = por %p556, %p557
      %p559 = scmp.ne.s32.totalorder %s548, %s549
      %p560 = scmp.eq.s32.totalorder %s34, 0
      %p561 = por %p559, %p560
      %p562 = scmp.ne.s32.totalorder %s548, %s549
      %p563 = scmp.eq.s32.totalorder %s35, 3
      %p564 = por %p562, %p563
      %p566 = scmp.ne.s32.totalorder %s549, %s565
      %p567 = scmp.eq.s32.totalorder %s35, 0
      %p568 = por %p566, %p567
      %s569 = ssub.s32 %s36, %s48
      %p570 = scmp.eq.s32.totalorder %s569, 0
      %s572 = sadd.s32 %s571, 1
      %s573 = scalar_select %p570, %s571, %s572
      %p576 = pneg %p570
      %p577 = scmp.eq.s32.totalorder %s29, 3
      %p578 = por %p576, %p577
      %p579 = scmp.ne.s32.totalorder %s571, %s574
      %p580 = scmp.eq.s32.totalorder %s29, 0
      %p581 = por %p579, %p580
      %p582 = scmp.ne.s32.totalorder %s571, %s574
      %p583 = scmp.eq.s32.totalorder %s34, 3
      %p584 = por %p582, %p583
      %p585 = scmp.ne.s32.totalorder %s574, %s575
      %p586 = scmp.eq.s32.totalorder %s34, 0
      %p587 = por %p585, %p586
      %p588 = scmp.ne.s32.totalorder %s574, %s575
      %p589 = scmp.eq.s32.totalorder %s35, 3
      %p590 = por %p588, %p589
      %p592 = scmp.ne.s32.totalorder %s575, %s591
      %p593 = scmp.eq.s32.totalorder %s35, 0
      %p594 = por %p592, %p593
      %p595 = scmp.le.s32.totalorder 1, %s29
      %p596 = scmp.lt.s32.totalorder %s29, 5
      %p597 = pnand %p595, %p596
      %p598 = pneg %p597
      // Predicated region
      $region9: #{encoder_forward.1} parent=5 // pred_check
        _
      $region10: #{encoder_forward.1} parent=5 // pred_check_branch
        %600 = sbr.rel (%p597) target = $region12
      $region11: #{encoder_forward.1} parent=5 // pred_region
        %s601 = ssub.s32 %s29, 1
      $region12: #{encoder_forward.1} parent=5 // pred_fallthru
        _
      %p602 = scmp.lt.s32.totalorder %s29, 4
      // Predicated region
      $region13: #{encoder_forward.1} parent=5 // pred_check
        %p603 = pneg %p602
      $region14: #{encoder_forward.1} parent=5 // pred_check_branch
        %605 = sbr.rel (%p603) target = $region16
      $region15: #{encoder_forward.1} parent=5 // pred_region
        // Predicated region
        $region17: #{encoder_forward.1} parent=15 // pred_check
          %p606 = pneg %p61
        $region18: #{encoder_forward.1} parent=15 // pred_check_branch
          %608 = sbr.rel (%p606) target = $region20
        $region19: #{encoder_forward.1} parent=15 // pred_region
          %p609 = scmp.lt.s32.totalorder %s36, 1
          %s610 = scalar_select %p609, %s36, 1
          %s611 = smul.addr %s610, 8
          %s612 = scalar_lea.vmem %s0, %s611
        $region20: #{encoder_forward.1} parent=15 // pred_fallthru
          _
        // Predicated region
        $region21: #{encoder_forward.1} parent=15 // pred_check
          %p613 = pneg %p87
        $region22: #{encoder_forward.1} parent=15 // pred_check_branch
          %615 = sbr.rel (%p613) target = $region24
        $region23: #{encoder_forward.1} parent=15 // pred_region
          %p616 = scmp.lt.s32.totalorder %s36, 1
          %s617 = scalar_select %p616, %s36, 1
          %s618 = scalar_lea.vmem %s1, %s617
        $region24: #{encoder_forward.1} parent=15 // pred_fallthru
          _
        // Predicated region
        $region25: #{encoder_forward.1} parent=15 // pred_check
          %p619 = pneg %p113
        $region26: #{encoder_forward.1} parent=15 // pred_check_branch
          %621 = sbr.rel (%p619) target = $region28
        $region27: #{encoder_forward.1} parent=15 // pred_region
          %p622 = scmp.lt.s32.totalorder %s37, 1
          %s623 = scalar_select %p622, %s37, 1
          %s624 = smul.addr %s623, 4
          %s625 = smul.addr %s624, 8
          %s626 = scalar_lea.vmem %s2, %s625
        $region28: #{encoder_forward.1} parent=15 // pred_fallthru
          _
        // Predicated region
        $region29: #{encoder_forward.1} parent=15 // pred_check
          %p627 = pneg %p139
        $region30: #{encoder_forward.1} parent=15 // pred_check_branch
          %629 = sbr.rel (%p627) target = $region32
        $region31: #{encoder_forward.1} parent=15 // pred_region
          %p630 = scmp.lt.s32.totalorder %s37, 1
          %s631 = scalar_select %p630, %s37, 1
          %s632 = scalar_lea.vmem %s3, %s631
        $region32: #{encoder_forward.1} parent=15 // pred_fallthru
          _
        // Predicated region
        $region33: #{encoder_forward.1} parent=15 // pred_check
          %p633 = pneg %p165
        $region34: #{encoder_forward.1} parent=15 // pred_check_branch
          %635 = sbr.rel (%p633) target = $region36
        $region35: #{encoder_forward.1} parent=15 // pred_region
          %p636 = scmp.lt.s32.totalorder %s37, 1
          %s637 = scalar_select %p636, %s37, 1
          %s638 = smul.addr %s637, 4
          %s639 = smul.addr %s638, 8
          %s640 = scalar_lea.vmem %s4, %s639
        $region36: #{encoder_forward.1} parent=15 // pred_fallthru
          _
        // Predicated region
        $region37: #{encoder_forward.1} parent=15 // pred_check
          %p641 = pneg %p191
        $region38: #{encoder_forward.1} parent=15 // pred_check_branch
          %643 = sbr.rel (%p641) target = $region40
        $region39: #{encoder_forward.1} parent=15 // pred_region
          %p644 = scmp.lt.s32.totalorder %s37, 1
          %s645 = scalar_select %p644, %s37, 1
          %s646 = scalar_lea.vmem %s5, %s645
        $region40: #{encoder_forward.1} parent=15 // pred_fallthru
          _
        // Predicated region
        $region41: #{encoder_forward.1} parent=15 // pred_check
          %p647 = pneg %p217
        $region42: #{encoder_forward.1} parent=15 // pred_check_branch
          %649 = sbr.rel (%p647) target = $region44
        $region43: #{encoder_forward.1} parent=15 // pred_region
          %p650 = scmp.lt.s32.totalorder %s37, 1
          %s651 = scalar_select %p650, %s37, 1
          %s652 = smul.addr %s651, 4
          %s653 = smul.addr %s652, 8
          %s654 = scalar_lea.vmem %s6, %s653
        $region44: #{encoder_forward.1} parent=15 // pred_fallthru
          _
        // Predicated region
        $region45: #{encoder_forward.1} parent=15 // pred_check
          %p655 = pneg %p243
        $region46: #{encoder_forward.1} parent=15 // pred_check_branch
          %657 = sbr.rel (%p655) target = $region48
        $region47: #{encoder_forward.1} parent=15 // pred_region
          %p658 = scmp.lt.s32.totalorder %s37, 1
          %s659 = scalar_select %p658, %s37, 1
          %s660 = smul.addr %s659, 4
          %s661 = smul.addr %s660, 8
          %s662 = scalar_lea.vmem %s7, %s661
        $region48: #{encoder_forward.1} parent=15 // pred_fallthru
          _
        // Predicated region
        $region49: #{encoder_forward.1} parent=15 // pred_check
          %p663 = pneg %p269
        $region50: #{encoder_forward.1} parent=15 // pred_check_branch
          %665 = sbr.rel (%p663) target = $region52
        $region51: #{encoder_forward.1} parent=15 // pred_region
          %p666 = scmp.lt.s32.totalorder %s37, 1
          %s667 = scalar_select %p666, %s37, 1
          %s668 = scalar_lea.vmem %s8, %s667
        $region52: #{encoder_forward.1} parent=15 // pred_fallthru
          _
        // Predicated region
        $region53: #{encoder_forward.1} parent=15 // pred_check
          %p669 = pneg %p295
        $region54: #{encoder_forward.1} parent=15 // pred_check_branch
          %671 = sbr.rel (%p669) target = $region56
        $region55: #{encoder_forward.1} parent=15 // pred_region
          %p672 = scmp.lt.s32.totalorder %s37, 1
          %s673 = scalar_select %p672, %s37, 1
          %s674 = smul.addr %s673, 4
          %s675 = smul.addr %s674, 8
          %s676 = scalar_lea.vmem %s9, %s675
        $region56: #{encoder_forward.1} parent=15 // pred_fallthru
          _
        // Predicated region
        $region57: #{encoder_forward.1} parent=15 // pred_check
          %p677 = pneg %p321
        $region58: #{encoder_forward.1} parent=15 // pred_check_branch
          %679 = sbr.rel (%p677) target = $region60
        $region59: #{encoder_forward.1} parent=15 // pred_region
          %p680 = scmp.lt.s32.totalorder %s37, 1
          %s681 = scalar_select %p680, %s37, 1
          %s682 = smul.addr %s681, 4
          %s683 = smul.addr %s682, 8
          %s684 = scalar_lea.vmem %s10, %s683
        $region60: #{encoder_forward.1} parent=15 // pred_fallthru
          _
        // Predicated region
        $region61: #{encoder_forward.1} parent=15 // pred_check
          %p685 = pneg %p347
        $region62: #{encoder_forward.1} parent=15 // pred_check_branch
          %687 = sbr.rel (%p685) target = $region64
        $region63: #{encoder_forward.1} parent=15 // pred_region
          %p688 = scmp.lt.s32.totalorder %s37, 1
          %s689 = scalar_select %p688, %s37, 1
          %s690 = scalar_lea.vmem %s11, %s689
        $region64: #{encoder_forward.1} parent=15 // pred_fallthru
          _
        // Predicated region
        $region65: #{encoder_forward.1} parent=15 // pred_check
          %p691 = pneg %p373
        $region66: #{encoder_forward.1} parent=15 // pred_check_branch
          %693 = sbr.rel (%p691) target = $region68
        $region67: #{encoder_forward.1} parent=15 // pred_region
          %p694 = scmp.lt.s32.totalorder %s37, 1
          %s695 = scalar_select %p694, %s37, 1
          %s696 = scalar_lea.vmem %s12, %s695
        $region68: #{encoder_forward.1} parent=15 // pred_fallthru
          _
        // Predicated region
        $region69: #{encoder_forward.1} parent=15 // pred_check
          %p697 = pneg %p399
        $region70: #{encoder_forward.1} parent=15 // pred_check_branch
          %699 = sbr.rel (%p697) target = $region72
        $region71: #{encoder_forward.1} parent=15 // pred_region
          %p700 = scmp.lt.s32.totalorder %s37, 1
          %s701 = scalar_select %p700, %s37, 1
          %s702 = scalar_lea.vmem %s13, %s701
        $region72: #{encoder_forward.1} parent=15 // pred_fallthru
          _
        // Predicated region
        $region73: #{encoder_forward.1} parent=15 // pred_check
          %p703 = pneg %p425
        $region74: #{encoder_forward.1} parent=15 // pred_check_branch
          %705 = sbr.rel (%p703) target = $region76
        $region75: #{encoder_forward.1} parent=15 // pred_region
          %p706 = scmp.lt.s32.totalorder %s37, 1
          %s707 = scalar_select %p706, %s37, 1
          %s708 = smul.addr %s707, 4
          %s709 = smul.addr %s708, 8
          %s710 = scalar_lea.vmem %s14, %s709
        $region76: #{encoder_forward.1} parent=15 // pred_fallthru
          _
        // Predicated region
        $region77: #{encoder_forward.1} parent=15 // pred_check
          %p711 = pneg %p451
        $region78: #{encoder_forward.1} parent=15 // pred_check_branch
          %713 = sbr.rel (%p711) target = $region80
        $region79: #{encoder_forward.1} parent=15 // pred_region
          %p714 = scmp.lt.s32.totalorder %s37, 1
          %s715 = scalar_select %p714, %s37, 1
          %s716 = scalar_lea.vmem %s15, %s715
        $region80: #{encoder_forward.1} parent=15 // pred_fallthru
          _
        // Predicated region
        $region81: #{encoder_forward.1} parent=15 // pred_check
          %p717 = pneg %p477
        $region82: #{encoder_forward.1} parent=15 // pred_check_branch
          %719 = sbr.rel (%p717) target = $region84
        $region83: #{encoder_forward.1} parent=15 // pred_region
          %p720 = scmp.lt.s32.totalorder %s37, 1
          %s721 = scalar_select %p720, %s37, 1
          %s722 = smul.addr %s721, 8
          %s723 = smul.addr %s722, 8
          %s724 = scalar_lea.vmem %s16, %s723
        $region84: #{encoder_forward.1} parent=15 // pred_fallthru
          _
        // Predicated region
        $region85: #{encoder_forward.1} parent=15 // pred_check
          %p725 = pneg %p503
        $region86: #{encoder_forward.1} parent=15 // pred_check_branch
          %727 = sbr.rel (%p725) target = $region88
        $region87: #{encoder_forward.1} parent=15 // pred_region
          %p728 = scmp.lt.s32.totalorder %s37, 1
          %s729 = scalar_select %p728, %s37, 1
          %s730 = scalar_lea.vmem %s17, %s729
        $region88: #{encoder_forward.1} parent=15 // pred_fallthru
          _
        // Predicated region
        $region89: #{encoder_forward.1} parent=15 // pred_check
          %p731 = pneg %p529
        $region90: #{encoder_forward.1} parent=15 // pred_check_branch
          %733 = sbr.rel (%p731) target = $region92
        $region91: #{encoder_forward.1} parent=15 // pred_region
          %p734 = scmp.lt.s32.totalorder %s37, 1
          %s735 = scalar_select %p734, %s37, 1
          %s736 = scalar_lea.vmem %s18, %s735
        $region92: #{encoder_forward.1} parent=15 // pred_fallthru
          _
        // Predicated region
        $region93: #{encoder_forward.1} parent=15 // pred_check
          %p737 = pneg %p555
        $region94: #{encoder_forward.1} parent=15 // pred_check_branch
          %739 = sbr.rel (%p737) target = $region96
        $region95: #{encoder_forward.1} parent=15 // pred_region
          %p740 = scmp.lt.s32.totalorder %s37, 1
          %s741 = scalar_select %p740, %s37, 1
          %s742 = scalar_lea.vmem %s19, %s741
        $region96: #{encoder_forward.1} parent=15 // pred_fallthru
          _
      $region16: #{encoder_forward.1} parent=5 // pred_fallthru
        _
      %p743 = scmp.le.s32.totalorder 1, %s29
      %p744 = scmp.lt.s32.totalorder %s29, 5
      %p745 = pnand %p743, %p744
      %p746 = pneg %p745
      // Predicated region
      $region97: #{encoder_forward.1} parent=5 // pred_check
        _
      $region98: #{encoder_forward.1} parent=5 // pred_check_branch
        %748 = sbr.rel (%p745) target = $region100
      $region99: #{encoder_forward.1} parent=5 // pred_region
        %s749 = ssub.s32 %s29, 1
        %p750 = scmp.lt.s32.totalorder %s38, 1
        %s751 = scalar_select %p750, %s38, 1
        %s752 = smul.addr %s751, 8
        %s753 = scalar_lea.vmem %s0, %s752
        %p754 = pneg %p67
        %p755 = pneg %p64
        %p756 = scmp.lt.s32.totalorder %s38, 1
        %s757 = scalar_select %p756, %s38, 1
        %s758 = scalar_lea.vmem %s1, %s757
        %p759 = pneg %p93
        %p760 = pneg %p90
        %p761 = scmp.lt.s32.totalorder %s39, 1
        %s762 = scalar_select %p761, %s39, 1
        %s763 = smul.addr %s762, 4
        %s764 = smul.addr %s763, 8
        %s765 = scalar_lea.vmem %s2, %s764
        %p766 = pneg %p119
        %p767 = pneg %p116
        %p768 = scmp.lt.s32.totalorder %s39, 1
        %s769 = scalar_select %p768, %s39, 1
        %s770 = scalar_lea.vmem %s3, %s769
        %p771 = pneg %p145
        %p772 = pneg %p142
        %p773 = scmp.lt.s32.totalorder %s39, 1
        %s774 = scalar_select %p773, %s39, 1
        %s775 = smul.addr %s774, 4
        %s776 = smul.addr %s775, 8
        %s777 = scalar_lea.vmem %s4, %s776
        %p778 = pneg %p171
        %p779 = pneg %p168
        %p780 = scmp.lt.s32.totalorder %s39, 1
        %s781 = scalar_select %p780, %s39, 1
        %s782 = scalar_lea.vmem %s5, %s781
        %p783 = pneg %p197
        %p784 = pneg %p194
        %p785 = scmp.lt.s32.totalorder %s39, 1
        %s786 = scalar_select %p785, %s39, 1
        %s787 = smul.addr %s786, 4
        %s788 = smul.addr %s787, 8
        %s789 = scalar_lea.vmem %s6, %s788
        %p790 = pneg %p223
        %p791 = pneg %p220
        %p792 = scmp.lt.s32.totalorder %s39, 1
        %s793 = scalar_select %p792, %s39, 1
        %s794 = smul.addr %s793, 4
        %s795 = smul.addr %s794, 8
        %s796 = scalar_lea.vmem %s7, %s795
        %p797 = pneg %p249
        %p798 = pneg %p246
        %p799 = scmp.lt.s32.totalorder %s39, 1
        %s800 = scalar_select %p799, %s39, 1
        %s801 = scalar_lea.vmem %s8, %s800
        %p802 = pneg %p275
        %p803 = pneg %p272
        %p804 = scmp.lt.s32.totalorder %s39, 1
        %s805 = scalar_select %p804, %s39, 1
        %s806 = smul.addr %s805, 4
        %s807 = smul.addr %s806, 8
        %s808 = scalar_lea.vmem %s9, %s807
        %p809 = pneg %p301
        %p810 = pneg %p298
        %p811 = scmp.lt.s32.totalorder %s39, 1
        %s812 = scalar_select %p811, %s39, 1
        %s813 = smul.addr %s812, 4
        %s814 = smul.addr %s813, 8
        %s815 = scalar_lea.vmem %s10, %s814
        %p816 = pneg %p327
        %p817 = pneg %p324
        %p818 = scmp.lt.s32.totalorder %s39, 1
        %s819 = scalar_select %p818, %s39, 1
        %s820 = scalar_lea.vmem %s11, %s819
        %p821 = pneg %p353
        %p822 = pneg %p350
        %p823 = scmp.lt.s32.totalorder %s39, 1
        %s824 = scalar_select %p823, %s39, 1
        %s825 = scalar_lea.vmem %s12, %s824
        %p826 = pneg %p379
        %p827 = pneg %p376
        %p828 = scmp.lt.s32.totalorder %s39, 1
        %s829 = scalar_select %p828, %s39, 1
        %s830 = scalar_lea.vmem %s13, %s829
        %p831 = pneg %p405
        %p832 = pneg %p402
        %p833 = scmp.lt.s32.totalorder %s39, 1
        %s834 = scalar_select %p833, %s39, 1
        %s835 = smul.addr %s834, 4
        %s836 = smul.addr %s835, 8
        %s837 = scalar_lea.vmem %s14, %s836
        %p838 = pneg %p431
        %p839 = pneg %p428
        %p840 = scmp.lt.s32.totalorder %s39, 1
        %s841 = scalar_select %p840, %s39, 1
        %s842 = scalar_lea.vmem %s15, %s841
        %p843 = pneg %p457
        %p844 = pneg %p454
        %p845 = scmp.lt.s32.totalorder %s39, 1
        %s846 = scalar_select %p845, %s39, 1
        %s847 = smul.addr %s846, 8
        %s848 = smul.addr %s847, 8
        %s849 = scalar_lea.vmem %s16, %s848
        %p850 = pneg %p483
        %p851 = pneg %p480
        %p852 = scmp.lt.s32.totalorder %s39, 1
        %s853 = scalar_select %p852, %s39, 1
        %s854 = scalar_lea.vmem %s17, %s853
        %p855 = pneg %p509
        %p856 = pneg %p506
        %p857 = scmp.lt.s32.totalorder %s39, 1
        %s858 = scalar_select %p857, %s39, 1
        %s859 = scalar_lea.vmem %s18, %s858
        %p860 = pneg %p535
        %p861 = pneg %p532
        %p862 = scmp.lt.s32.totalorder %s39, 1
        %s863 = scalar_select %p862, %s39, 1
        %s864 = scalar_lea.vmem %s19, %s863
        %p865 = pneg %p561
        %p866 = pneg %p558
        %p867 = pneg %p587
        %p868 = pneg %p584
        %s869 = sand.u32 %s574, 1
        %s870 = scalar_lea.sflag [#allocation4], %s869
        %s871 = sand.u32 %s574, 1
        %s872 = smul.addr %s871, 8
        %s873 = scalar_lea.vmem [#allocation3], %s872
        %p874 = scmp.lt.s32.totalorder %s38, 1
        %s875 = scalar_select %p874, %s38, 1
        %s876 = smul.addr %s875, 8
        %s877 = scalar_lea.vmem %s0, %s876
        %p878 = scmp.lt.s32.totalorder %s38, 1
        %s879 = scalar_select %p878, %s38, 1
        %s880 = scalar_lea.vmem %s1, %s879
        %p881 = scmp.lt.s32.totalorder %s39, 1
        %s882 = scalar_select %p881, %s39, 1
        %s883 = smul.addr %s882, 4
        %s884 = smul.addr %s883, 8
        %s885 = scalar_lea.vmem %s2, %s884
        %p886 = scmp.lt.s32.totalorder %s39, 1
        %s887 = scalar_select %p886, %s39, 1
        %s888 = scalar_lea.vmem %s3, %s887
        %p889 = scmp.lt.s32.totalorder %s39, 1
        %s890 = scalar_select %p889, %s39, 1
        %s891 = smul.addr %s890, 4
        %s892 = smul.addr %s891, 8
        %s893 = scalar_lea.vmem %s4, %s892
        %p894 = scmp.lt.s32.totalorder %s39, 1
        %s895 = scalar_select %p894, %s39, 1
        %s896 = scalar_lea.vmem %s5, %s895
        %p897 = scmp.lt.s32.totalorder %s39, 1
        %s898 = scalar_select %p897, %s39, 1
        %s899 = smul.addr %s898, 4
        %s900 = smul.addr %s899, 8
        %s901 = scalar_lea.vmem %s6, %s900
        %p902 = scmp.lt.s32.totalorder %s39, 1
        %s903 = scalar_select %p902, %s39, 1
        %s904 = smul.addr %s903, 4
        %s905 = smul.addr %s904, 8
        %s906 = scalar_lea.vmem %s7, %s905
        %p907 = scmp.lt.s32.totalorder %s39, 1
        %s908 = scalar_select %p907, %s39, 1
        %s909 = scalar_lea.vmem %s8, %s908
        %p910 = scmp.lt.s32.totalorder %s39, 1
        %s911 = scalar_select %p910, %s39, 1
        %s912 = smul.addr %s911, 4
        %s913 = smul.addr %s912, 8
        %s914 = scalar_lea.vmem %s9, %s913
        %p915 = scmp.lt.s32.totalorder %s39, 1
        %s916 = scalar_select %p915, %s39, 1
        %s917 = smul.addr %s916, 4
        %s918 = smul.addr %s917, 8
        %s919 = scalar_lea.vmem %s10, %s918
        %p920 = scmp.lt.s32.totalorder %s39, 1
        %s921 = scalar_select %p920, %s39, 1
        %s922 = scalar_lea.vmem %s11, %s921
        %p923 = scmp.lt.s32.totalorder %s39, 1
        %s924 = scalar_select %p923, %s39, 1
        %s925 = scalar_lea.vmem %s12, %s924
        %p926 = scmp.lt.s32.totalorder %s39, 1
        %s927 = scalar_select %p926, %s39, 1
        %s928 = scalar_lea.vmem %s13, %s927
        %p929 = scmp.lt.s32.totalorder %s39, 1
        %s930 = scalar_select %p929, %s39, 1
        %s931 = smul.addr %s930, 4
        %s932 = smul.addr %s931, 8
        %s933 = scalar_lea.vmem %s14, %s932
        %p934 = scmp.lt.s32.totalorder %s39, 1
        %s935 = scalar_select %p934, %s39, 1
        %s936 = scalar_lea.vmem %s15, %s935
        %p937 = scmp.lt.s32.totalorder %s39, 1
        %s938 = scalar_select %p937, %s39, 1
        %s939 = smul.addr %s938, 8
        %s940 = smul.addr %s939, 8
        %s941 = scalar_lea.vmem %s16, %s940
        %p942 = scmp.lt.s32.totalorder %s39, 1
        %s943 = scalar_select %p942, %s39, 1
        %s944 = scalar_lea.vmem %s17, %s943
        %p945 = scmp.lt.s32.totalorder %s39, 1
        %s946 = scalar_select %p945, %s39, 1
        %s947 = scalar_lea.vmem %s18, %s946
        %p948 = scmp.lt.s32.totalorder %s39, 1
        %s949 = scalar_select %p948, %s39, 1
        %s950 = scalar_lea.vmem %s19, %s949
        %p951 = scmp.eq.s32.totalorder %s39, 0
        // Predicated region
        $region101: #{encoder_forward.1} parent=99 // pred_check
          %p952 = pneg %p951
        $region102: #{encoder_forward.1} parent=99 // pred_check_branch
          %954 = sbr.rel (%p952) target = $region104
        $region103: #{encoder_forward.1} parent=99 // pred_region
          %v955 = vld [vmem:[%s877] sm:$0xff]
          %vm956 = vcmask 261120
          %957 = vst.msk [vmem:[#allocation2] sm:$0xff] %vm956, %v955
        $region104: #{encoder_forward.1} parent=99 // pred_fallthru
          _
        %v958 = vld [vmem:[#allocation2] sm:$0xff]
        %v959 = vld [vmem:[%s880] sm:$0x1]
        %v960 = vld [vmem:[%s885] sm:$0xff]
        %v961 = vld [vmem:[%s885 + $0x8] sm:$0xff]
        %v962 = vld [vmem:[%s885 + $0x10] sm:$0xff]
        %v963 = vld [vmem:[%s885 + $0x18] sm:$0xff]
        %v964 = vld [vmem:[%s888] sm:$0x1]
        %v966 = vlaneseq
        %v967 = vshrl.u32 %v966, 7
        %v968 = vsub.s32 0, %v967
        %v969 = vrot.slane %v964, %v968
        %vm971 = vcmask 261120
        %v973 = vsel %vm971, %v958, 0
        %975 = vmatprep.subr.mxu0 0.0
        %976 = vmatpush1.msra.mxu0 %v960
        %977 = vmatprep.subr.mxu0 0.0
        %978 = vmatpush1.msra.mxu0 %v961
        %979 = vmatprep.subr.mxu0 0.0
        %980 = vmatpush1.msra.mxu0 %v962
        %981 = vmatprep.subr.mxu0 0.0
        %982 = vmatpush1.msra.mxu0 %v963
        %983 = vmatprep.subr.mxu0 0.0
        %984 = vmatpush1.msra.mxu0 0.0
        %985 = vmatprep.subr.mxu0 0.0
        %986 = vmatpush1.msra.mxu0 0.0
        %987 = vmatprep.subr.mxu0 0.0
        %988 = vmatpush1.msra.mxu0 0.0
        %989 = vmatprep.subr.mxu0 0.0
        %990 = vmatpush1.msra.mxu0 0.0
        %991 = vmatprep.subr.mxu0 0.0
        %992 = vmatpush1.msra.mxu0 0.0
        %993 = vmatprep.subr.mxu0 0.0
        %994 = vmatpush1.msra.mxu0 0.0
        %995 = vmatprep.subr.mxu0 0.0
        %996 = vmatpush1.msra.mxu0 0.0
        %997 = vmatprep.subr.mxu0 0.0
        %998 = vmatpush1.msra.mxu0 0.0
        %999 = vmatprep.subr.mxu0 0.0
        %1000 = vmatpush1.msra.mxu0 0.0
        %1001 = vmatprep.subr.mxu0 0.0
        %1002 = vmatpush1.msra.mxu0 0.0
        %1003 = vmatprep.subr.mxu0 0.0
        %1004 = vmatpush1.msra.mxu0 0.0
        %1005 = vmatprep.subr.mxu0 0.0
        %1006 = vmatpush1.msra.mxu0 0.0
        %1007 = vmatprep.subr.mxu0 0.0
        %1008 = vmatpush1.msra.mxu0 0.0
        %1009 = vmatprep.subr.mxu0 0.0
        %1010 = vmatpush1.msra.mxu0 0.0
        %1011 = vmatprep.subr.mxu0 0.0
        %1012 = vmatpush1.msra.mxu0 0.0
        %1013 = vmatprep.subr.mxu0 0.0
        %1014 = vmatpush1.msra.mxu0 0.0
        %1015 = vmatprep.subr.mxu0 0.0
        %1016 = vmatpush1.msra.mxu0 0.0
        %1017 = vmatprep.subr.mxu0 0.0
        %1018 = vmatpush1.msra.mxu0 0.0
        %1019 = vmatprep.subr.mxu0 0.0
        %1020 = vmatpush1.msra.mxu0 0.0
        %1021 = vmatprep.subr.mxu0 0.0
        %1022 = vmatpush1.msra.mxu0 0.0
        %1023 = vmatprep.subr.mxu0 0.0
        %1024 = vmatpush1.msra.mxu0 0.0
        %1025 = vmatprep.subr.mxu0 0.0
        %1026 = vmatpush1.msra.mxu0 0.0
        %1027 = vmatprep.subr.mxu0 0.0
        %1028 = vmatpush1.msra.mxu0 0.0
        %1029 = vmatprep.subr.mxu0 0.0
        %1030 = vmatpush1.msra.mxu0 0.0
        %1031 = vmatprep.subr.mxu0 0.0
        %1032 = vmatpush1.msra.mxu0 0.0
        %1033 = vmatprep.subr.mxu0 0.0
        %1034 = vmatpush1.msra.mxu0 0.0
        %1035 = vmatprep.subr.mxu0 0.0
        %1036 = vmatpush1.msra.mxu0 0.0
        %1037 = vmatprep.subr.mxu0 0.0
        %1038 = vmatpush1.msra.mxu0 0.0
        %1039 = vmatprep.mubr.f32.mxu0 0.0
        %1040 = vmatmul.mubr.f32.gmra.mrb[0].mxu0 %v973
        %v1041 = vpop.f32.mrb[0].mxu0
        %v1042 = vadd.f32 %v969, %v1041
        %v1043 = vpop.f32.mrb[0].mxu0
        %1044 = vdwg.mxu0
        %1045 = vxpose.xlu0.b32.start [1/16] %v1042, 128
        %1046 = vxpose.xlu0.b32.cont [2/16] 0.0, 128
        %1047 = vxpose.xlu0.b32.cont [3/16] 0.0, 128
        %1048 = vxpose.xlu0.b32.cont [4/16] 0.0, 128
        %1049 = vxpose.xlu0.b32.cont [5/16] 0.0, 128
        %1050 = vxpose.xlu0.b32.cont [6/16] 0.0, 128
        %1051 = vxpose.xlu0.b32.cont [7/16] 0.0, 128
        %1052 = vxpose.xlu0.b32.cont [8/16] 0.0, 128
        %1053 = vxpose.xlu0.b32.cont [9/16] 0.0, 128
        %1054 = vxpose.xlu0.b32.cont [10/16] 0.0, 128
        %1055 = vxpose.xlu0.b32.cont [11/16] 0.0, 128
        %1056 = vxpose.xlu0.b32.cont [12/16] 0.0, 128
        %1057 = vxpose.xlu0.b32.cont [13/16] 0.0, 128
        %1058 = vxpose.xlu0.b32.cont [14/16] 0.0, 128
        %1059 = vxpose.xlu0.b32.cont [15/16] 0.0, 128
        %1060 = vxpose.xlu0.b32.end [16/16] 0.0, 128
        %v1061 = vpop.trf.xlu0
        %v1062 = vpop.trf.xlu0
        %v1063 = vpop.trf.xlu0
        %v1064 = vpop.trf.xlu0
        %v1065 = vpop.trf.xlu0
        %v1066 = vpop.trf.xlu0
        %v1067 = vpop.trf.xlu0
        %v1068 = vpop.trf.xlu0
        %v1069 = vpop.trf.xlu0
        %v1070 = vpop.trf.xlu0
        %v1071 = vpop.trf.xlu0
        %v1072 = vpop.trf.xlu0
        %v1073 = vpop.trf.xlu0
        %v1074 = vpop.trf.xlu0
        %v1075 = vpop.trf.xlu0
        %v1076 = vpop.trf.xlu0
        %1077 = vxpose.xlu0.b32.start [1/16] %v1061, 128
        %1078 = vxpose.xlu0.b32.cont [2/16] 0.0, 128
        %1079 = vxpose.xlu0.b32.cont [3/16] 0.0, 128
        %1080 = vxpose.xlu0.b32.cont [4/16] 0.0, 128
        %1081 = vxpose.xlu0.b32.cont [5/16] 0.0, 128
        %1082 = vxpose.xlu0.b32.cont [6/16] 0.0, 128
        %1083 = vxpose.xlu0.b32.cont [7/16] 0.0, 128
        %1084 = vxpose.xlu0.b32.cont [8/16] 0.0, 128
        %1085 = vxpose.xlu0.b32.cont [9/16] 0.0, 128
        %1086 = vxpose.xlu0.b32.cont [10/16] 0.0, 128
        %1087 = vxpose.xlu0.b32.cont [11/16] 0.0, 128
        %1088 = vxpose.xlu0.b32.cont [12/16] 0.0, 128
        %1089 = vxpose.xlu0.b32.cont [13/16] 0.0, 128
        %1090 = vxpose.xlu0.b32.cont [14/16] 0.0, 128
        %1091 = vxpose.xlu0.b32.cont [15/16] 0.0, 128
        %1092 = vxpose.xlu0.b32.end [16/16] 0.0, 128
        %v1093 = vpop.trf.xlu0
        %v1094 = vpop.trf.xlu0
        %v1095 = vpop.trf.xlu0
        %v1096 = vpop.trf.xlu0
        %v1097 = vpop.trf.xlu0
        %v1098 = vpop.trf.xlu0
        %v1099 = vpop.trf.xlu0
        %v1100 = vpop.trf.xlu0
        %v1101 = vpop.trf.xlu0
        %v1102 = vpop.trf.xlu0
        %v1103 = vpop.trf.xlu0
        %v1104 = vpop.trf.xlu0
        %v1105 = vpop.trf.xlu0
        %v1106 = vpop.trf.xlu0
        %v1107 = vpop.trf.xlu0
        %v1108 = vpop.trf.xlu0
        %1109 = vxpose.xlu0.b32.start [1/16] %v1062, 128
        %1110 = vxpose.xlu0.b32.cont [2/16] 0.0, 128
        %1111 = vxpose.xlu0.b32.cont [3/16] 0.0, 128
        %1112 = vxpose.xlu0.b32.cont [4/16] 0.0, 128
        %1113 = vxpose.xlu0.b32.cont [5/16] 0.0, 128
        %1114 = vxpose.xlu0.b32.cont [6/16] 0.0, 128
        %1115 = vxpose.xlu0.b32.cont [7/16] 0.0, 128
        %1116 = vxpose.xlu0.b32.cont [8/16] 0.0, 128
        %1117 = vxpose.xlu0.b32.cont [9/16] 0.0, 128
        %1118 = vxpose.xlu0.b32.cont [10/16] 0.0, 128
        %1119 = vxpose.xlu0.b32.cont [11/16] 0.0, 128
        %1120 = vxpose.xlu0.b32.cont [12/16] 0.0, 128
        %1121 = vxpose.xlu0.b32.cont [13/16] 0.0, 128
        %1122 = vxpose.xlu0.b32.cont [14/16] 0.0, 128
        %1123 = vxpose.xlu0.b32.cont [15/16] 0.0, 128
        %1124 = vxpose.xlu0.b32.end [16/16] 0.0, 128
        %v1125 = vpop.trf.xlu0
        %v1126 = vpop.trf.xlu0
        %v1127 = vpop.trf.xlu0
        %v1128 = vpop.trf.xlu0
        %v1129 = vpop.trf.xlu0
        %v1130 = vpop.trf.xlu0
        %v1131 = vpop.trf.xlu0
        %v1132 = vpop.trf.xlu0
        %v1133 = vpop.trf.xlu0
        %v1134 = vpop.trf.xlu0
        %v1135 = vpop.trf.xlu0
        %v1136 = vpop.trf.xlu0
        %v1137 = vpop.trf.xlu0
        %v1138 = vpop.trf.xlu0
        %v1139 = vpop.trf.xlu0
        %v1140 = vpop.trf.xlu0
        %1141 = vxpose.xlu0.b32.start [1/16] %v1063, 128
        %1142 = vxpose.xlu0.b32.cont [2/16] 0.0, 128
        %1143 = vxpose.xlu0.b32.cont [3/16] 0.0, 128
        %1144 = vxpose.xlu0.b32.cont [4/16] 0.0, 128
        %1145 = vxpose.xlu0.b32.cont [5/16] 0.0, 128
        %1146 = vxpose.xlu0.b32.cont [6/16] 0.0, 128
        %1147 = vxpose.xlu0.b32.cont [7/16] 0.0, 128
        %1148 = vxpose.xlu0.b32.cont [8/16] 0.0, 128
        %1149 = vxpose.xlu0.b32.cont [9/16] 0.0, 128
        %1150 = vxpose.xlu0.b32.cont [10/16] 0.0, 128
        %1151 = vxpose.xlu0.b32.cont [11/16] 0.0, 128
        %1152 = vxpose.xlu0.b32.cont [12/16] 0.0, 128
        %1153 = vxpose.xlu0.b32.cont [13/16] 0.0, 128
        %1154 = vxpose.xlu0.b32.cont [14/16] 0.0, 128
        %1155 = vxpose.xlu0.b32.cont [15/16] 0.0, 128
        %1156 = vxpose.xlu0.b32.end [16/16] 0.0, 128
        %v1157 = vpop.trf.xlu0
        %v1158 = vpop.trf.xlu0
        %v1159 = vpop.trf.xlu0
        %v1160 = vpop.trf.xlu0
        %v1161 = vpop.trf.xlu0
        %v1162 = vpop.trf.xlu0
        %v1163 = vpop.trf.xlu0
        %v1164 = vpop.trf.xlu0
        %v1165 = vpop.trf.xlu0
        %v1166 = vpop.trf.xlu0
        %v1167 = vpop.trf.xlu0
        %v1168 = vpop.trf.xlu0
        %v1169 = vpop.trf.xlu0
        %v1170 = vpop.trf.xlu0
        %v1171 = vpop.trf.xlu0
        %v1172 = vpop.trf.xlu0
        %1173 = vxpose.xlu0.b32.start [1/16] %v1064, 128
        %1174 = vxpose.xlu0.b32.cont [2/16] 0.0, 128
        %1175 = vxpose.xlu0.b32.cont [3/16] 0.0, 128
        %1176 = vxpose.xlu0.b32.cont [4/16] 0.0, 128
        %1177 = vxpose.xlu0.b32.cont [5/16] 0.0, 128
        %1178 = vxpose.xlu0.b32.cont [6/16] 0.0, 128
        %1179 = vxpose.xlu0.b32.cont [7/16] 0.0, 128
        %1180 = vxpose.xlu0.b32.cont [8/16] 0.0, 128
        %1181 = vxpose.xlu0.b32.cont [9/16] 0.0, 128
        %1182 = vxpose.xlu0.b32.cont [10/16] 0.0, 128
        %1183 = vxpose.xlu0.b32.cont [11/16] 0.0, 128
        %1184 = vxpose.xlu0.b32.cont [12/16] 0.0, 128
        %1185 = vxpose.xlu0.b32.cont [13/16] 0.0, 128
        %1186 = vxpose.xlu0.b32.cont [14/16] 0.0, 128
        %1187 = vxpose.xlu0.b32.cont [15/16] 0.0, 128
        %1188 = vxpose.xlu0.b32.end [16/16] 0.0, 128
        %v1189 = vpop.trf.xlu0
        %v1190 = vpop.trf.xlu0
        %v1191 = vpop.trf.xlu0
        %v1192 = vpop.trf.xlu0
        %v1193 = vpop.trf.xlu0
        %v1194 = vpop.trf.xlu0
        %v1195 = vpop.trf.xlu0
        %v1196 = vpop.trf.xlu0
        %v1197 = vpop.trf.xlu0
        %v1198 = vpop.trf.xlu0
        %v1199 = vpop.trf.xlu0
        %v1200 = vpop.trf.xlu0
        %v1201 = vpop.trf.xlu0
        %v1202 = vpop.trf.xlu0
        %v1203 = vpop.trf.xlu0
        %v1204 = vpop.trf.xlu0
        %vm1205 = vcmask 64512
        %v1207 = vsel %vm1205, %v1093, 0
        %1209 = vmatprep.subr.mxu0 0.0
        %1210 = vmatpush1.msra.mxu0 %v1065
        %1211 = vmatprep.subr.mxu0 0.0
        %1212 = vmatpush1.msra.mxu0 0.0
        %1213 = vmatprep.subr.mxu0 0.0
        %1214 = vmatpush1.msra.mxu0 0.0
        %1215 = vmatprep.subr.mxu0 0.0
        %1216 = vmatpush1.msra.mxu0 0.0
        %1217 = vmatprep.subr.mxu0 0.0
        %1218 = vmatpush1.msra.mxu0 0.0
        %1219 = vmatprep.subr.mxu0 0.0
        %1220 = vmatpush1.msra.mxu0 0.0
        %1221 = vmatprep.subr.mxu0 0.0
        %1222 = vmatpush1.msra.mxu0 0.0
        %1223 = vmatprep.subr.mxu0 0.0
        %1224 = vmatpush1.msra.mxu0 0.0
        %1225 = vmatprep.subr.mxu0 0.0
        %1226 = vmatpush1.msra.mxu0 0.0
        %1227 = vmatprep.subr.mxu0 0.0
        %1228 = vmatpush1.msra.mxu0 0.0
        %1229 = vmatprep.subr.mxu0 0.0
        %1230 = vmatpush1.msra.mxu0 0.0
        %1231 = vmatprep.subr.mxu0 0.0
        %1232 = vmatpush1.msra.mxu0 0.0
        %1233 = vmatprep.subr.mxu0 0.0
        %1234 = vmatpush1.msra.mxu0 0.0
        %1235 = vmatprep.subr.mxu0 0.0
        %1236 = vmatpush1.msra.mxu0 0.0
        %1237 = vmatprep.subr.mxu0 0.0
        %1238 = vmatpush1.msra.mxu0 0.0
        %1239 = vmatprep.subr.mxu0 0.0
        %1240 = vmatpush1.msra.mxu0 0.0
        %1241 = vmatprep.subr.mxu0 0.0
        %1242 = vmatpush1.msra.mxu0 0.0
        %1243 = vmatprep.subr.mxu0 0.0
        %1244 = vmatpush1.msra.mxu0 0.0
        %1245 = vmatprep.subr.mxu0 0.0
        %1246 = vmatpush1.msra.mxu0 0.0
        %1247 = vmatprep.subr.mxu0 0.0
        %1248 = vmatpush1.msra.mxu0 0.0
        %1249 = vmatprep.subr.mxu0 0.0
        %1250 = vmatpush1.msra.mxu0 0.0
        %1251 = vmatprep.subr.mxu0 0.0
        %1252 = vmatpush1.msra.mxu0 0.0
        %1253 = vmatprep.subr.mxu0 0.0
        %1254 = vmatpush1.msra.mxu0 0.0
        %1255 = vmatprep.subr.mxu0 0.0
        %1256 = vmatpush1.msra.mxu0 0.0
        %1257 = vmatprep.subr.mxu0 0.0
        %1258 = vmatpush1.msra.mxu0 0.0
        %1259 = vmatprep.subr.mxu0 0.0
        %1260 = vmatpush1.msra.mxu0 0.0
        %1261 = vmatprep.subr.mxu0 0.0
        %1262 = vmatpush1.msra.mxu0 0.0
        %1263 = vmatprep.subr.mxu0 0.0
        %1264 = vmatpush1.msra.mxu0 0.0
        %1265 = vmatprep.subr.mxu0 0.0
        %1266 = vmatpush1.msra.mxu0 0.0
        %1267 = vmatprep.subr.mxu0 0.0
        %1268 = vmatpush1.msra.mxu0 0.0
        %1269 = vmatprep.subr.mxu0 0.0
        %1270 = vmatpush1.msra.mxu0 0.0
        %1271 = vmatprep.subr.mxu0 0.0
        %1272 = vmatpush1.msra.mxu0 0.0
        %1273 = vmatprep.mubr.f32.mxu0 0.0
        %1274 = vmatmul.mubr.f32.gmra.mrb[0].mxu0 %v1207
        %v1275 = vpop.f32.mrb[0].mxu0
        %v1276 = vadd.f32 0.0, %v1275
        %v1277 = vpop.f32.mrb[0].mxu0
        %1278 = vdwg.mxu0
        %v1280 = vsel %vm1205, %v1125, 0
        %1282 = vmatprep.subr.mxu0 0.0
        %1283 = vmatpush1.msra.mxu0 %v1066
        %1284 = vmatprep.subr.mxu0 0.0
        %1285 = vmatpush1.msra.mxu0 0.0
        %1286 = vmatprep.subr.mxu0 0.0
        %1287 = vmatpush1.msra.mxu0 0.0
        %1288 = vmatprep.subr.mxu0 0.0
        %1289 = vmatpush1.msra.mxu0 0.0
        %1290 = vmatprep.subr.mxu0 0.0
        %1291 = vmatpush1.msra.mxu0 0.0
        %1292 = vmatprep.subr.mxu0 0.0
        %1293 = vmatpush1.msra.mxu0 0.0
        %1294 = vmatprep.subr.mxu0 0.0
        %1295 = vmatpush1.msra.mxu0 0.0
        %1296 = vmatprep.subr.mxu0 0.0
        %1297 = vmatpush1.msra.mxu0 0.0
        %1298 = vmatprep.subr.mxu0 0.0
        %1299 = vmatpush1.msra.mxu0 0.0
        %1300 = vmatprep.subr.mxu0 0.0
        %1301 = vmatpush1.msra.mxu0 0.0
        %1302 = vmatprep.subr.mxu0 0.0
        %1303 = vmatpush1.msra.mxu0 0.0
        %1304 = vmatprep.subr.mxu0 0.0
        %1305 = vmatpush1.msra.mxu0 0.0
        %1306 = vmatprep.subr.mxu0 0.0
        %1307 = vmatpush1.msra.mxu0 0.0
        %1308 = vmatprep.subr.mxu0 0.0
        %1309 = vmatpush1.msra.mxu0 0.0
        %1310 = vmatprep.subr.mxu0 0.0
        %1311 = vmatpush1.msra.mxu0 0.0
        %1312 = vmatprep.subr.mxu0 0.0
        %1313 = vmatpush1.msra.mxu0 0.0
        %1314 = vmatprep.subr.mxu0 0.0
        %1315 = vmatpush1.msra.mxu0 0.0
        %1316 = vmatprep.subr.mxu0 0.0
        %1317 = vmatpush1.msra.mxu0 0.0
        %1318 = vmatprep.subr.mxu0 0.0
        %1319 = vmatpush1.msra.mxu0 0.0
        %1320 = vmatprep.subr.mxu0 0.0
        %1321 = vmatpush1.msra.mxu0 0.0
        %1322 = vmatprep.subr.mxu0 0.0
        %1323 = vmatpush1.msra.mxu0 0.0
        %1324 = vmatprep.subr.mxu0 0.0
        %1325 = vmatpush1.msra.mxu0 0.0
        %1326 = vmatprep.subr.mxu0 0.0
        %1327 = vmatpush1.msra.mxu0 0.0
        %1328 = vmatprep.subr.mxu0 0.0
        %1329 = vmatpush1.msra.mxu0 0.0
        %1330 = vmatprep.subr.mxu0 0.0
        %1331 = vmatpush1.msra.mxu0 0.0
        %1332 = vmatprep.subr.mxu0 0.0
        %1333 = vmatpush1.msra.mxu0 0.0
        %1334 = vmatprep.subr.mxu0 0.0
        %1335 = vmatpush1.msra.mxu0 0.0
        %1336 = vmatprep.subr.mxu0 0.0
        %1337 = vmatpush1.msra.mxu0 0.0
        %1338 = vmatprep.subr.mxu0 0.0
        %1339 = vmatpush1.msra.mxu0 0.0
        %1340 = vmatprep.subr.mxu0 0.0
        %1341 = vmatpush1.msra.mxu0 0.0
        %1342 = vmatprep.subr.mxu0 0.0
        %1343 = vmatpush1.msra.mxu0 0.0
        %1344 = vmatprep.subr.mxu0 0.0
        %1345 = vmatpush1.msra.mxu0 0.0
        %1346 = vmatprep.mubr.f32.mxu0 0.0
        %1347 = vmatmul.mubr.f32.gmra.mrb[0].mxu0 %v1280
        %v1348 = vpop.f32.mrb[0].mxu0
        %v1349 = vadd.f32 0.0, %v1348
        %v1350 = vpop.f32.mrb[0].mxu0
        %1351 = vdwg.mxu0
        %v1353 = vsel %vm1205, %v1157, 0
        %1355 = vmatprep.subr.mxu0 0.0
        %1356 = vmatpush1.msra.mxu0 %v1067
        %1357 = vmatprep.subr.mxu0 0.0
        %1358 = vmatpush1.msra.mxu0 0.0
        %1359 = vmatprep.subr.mxu0 0.0
        %1360 = vmatpush1.msra.mxu0 0.0
        %1361 = vmatprep.subr.mxu0 0.0
        %1362 = vmatpush1.msra.mxu0 0.0
        %1363 = vmatprep.subr.mxu0 0.0
        %1364 = vmatpush1.msra.mxu0 0.0
        %1365 = vmatprep.subr.mxu0 0.0
        %1366 = vmatpush1.msra.mxu0 0.0
        %1367 = vmatprep.subr.mxu0 0.0
        %1368 = vmatpush1.msra.mxu0 0.0
        %1369 = vmatprep.subr.mxu0 0.0
        %1370 = vmatpush1.msra.mxu0 0.0
        %1371 = vmatprep.subr.mxu0 0.0
        %1372 = vmatpush1.msra.mxu0 0.0
        %1373 = vmatprep.subr.mxu0 0.0
        %1374 = vmatpush1.msra.mxu0 0.0
        %1375 = vmatprep.subr.mxu0 0.0
        %1376 = vmatpush1.msra.mxu0 0.0
        %1377 = vmatprep.subr.mxu0 0.0
        %1378 = vmatpush1.msra.mxu0 0.0
        %1379 = vmatprep.subr.mxu0 0.0
        %1380 = vmatpush1.msra.mxu0 0.0
        %1381 = vmatprep.subr.mxu0 0.0
        %1382 = vmatpush1.msra.mxu0 0.0
        %1383 = vmatprep.subr.mxu0 0.0
        %1384 = vmatpush1.msra.mxu0 0.0
        %1385 = vmatprep.subr.mxu0 0.0
        %1386 = vmatpush1.msra.mxu0 0.0
        %1387 = vmatprep.subr.mxu0 0.0
        %1388 = vmatpush1.msra.mxu0 0.0
        %1389 = vmatprep.subr.mxu0 0.0
        %1390 = vmatpush1.msra.mxu0 0.0
        %1391 = vmatprep.subr.mxu0 0.0
        %1392 = vmatpush1.msra.mxu0 0.0
        %1393 = vmatprep.subr.mxu0 0.0
        %1394 = vmatpush1.msra.mxu0 0.0
        %1395 = vmatprep.subr.mxu0 0.0
        %1396 = vmatpush1.msra.mxu0 0.0
        %1397 = vmatprep.subr.mxu0 0.0
        %1398 = vmatpush1.msra.mxu0 0.0
        %1399 = vmatprep.subr.mxu0 0.0
        %1400 = vmatpush1.msra.mxu0 0.0
        %1401 = vmatprep.subr.mxu0 0.0
        %1402 = vmatpush1.msra.mxu0 0.0
        %1403 = vmatprep.subr.mxu0 0.0
        %1404 = vmatpush1.msra.mxu0 0.0
        %1405 = vmatprep.subr.mxu0 0.0
        %1406 = vmatpush1.msra.mxu0 0.0
        %1407 = vmatprep.subr.mxu0 0.0
        %1408 = vmatpush1.msra.mxu0 0.0
        %1409 = vmatprep.subr.mxu0 0.0
        %1410 = vmatpush1.msra.mxu0 0.0
        %1411 = vmatprep.subr.mxu0 0.0
        %1412 = vmatpush1.msra.mxu0 0.0
        %1413 = vmatprep.subr.mxu0 0.0
        %1414 = vmatpush1.msra.mxu0 0.0
        %1415 = vmatprep.subr.mxu0 0.0
        %1416 = vmatpush1.msra.mxu0 0.0
        %1417 = vmatprep.subr.mxu0 0.0
        %1418 = vmatpush1.msra.mxu0 0.0
        %1419 = vmatprep.mubr.f32.mxu0 0.0
        %1420 = vmatmul.mubr.f32.gmra.mrb[0].mxu0 %v1353
        %v1421 = vpop.f32.mrb[0].mxu0
        %v1422 = vadd.f32 0.0, %v1421
        %v1423 = vpop.f32.mrb[0].mxu0
        %1424 = vdwg.mxu0
        %v1426 = vsel %vm1205, %v1189, 0
        %1428 = vmatprep.subr.mxu0 0.0
        %1429 = vmatpush1.msra.mxu0 %v1068
        %1430 = vmatprep.subr.mxu0 0.0
        %1431 = vmatpush1.msra.mxu0 0.0
        %1432 = vmatprep.subr.mxu0 0.0
        %1433 = vmatpush1.msra.mxu0 0.0
        %1434 = vmatprep.subr.mxu0 0.0
        %1435 = vmatpush1.msra.mxu0 0.0
        %1436 = vmatprep.subr.mxu0 0.0
        %1437 = vmatpush1.msra.mxu0 0.0
        %1438 = vmatprep.subr.mxu0 0.0
        %1439 = vmatpush1.msra.mxu0 0.0
        %1440 = vmatprep.subr.mxu0 0.0
        %1441 = vmatpush1.msra.mxu0 0.0
        %1442 = vmatprep.subr.mxu0 0.0
        %1443 = vmatpush1.msra.mxu0 0.0
        %1444 = vmatprep.subr.mxu0 0.0
        %1445 = vmatpush1.msra.mxu0 0.0
        %1446 = vmatprep.subr.mxu0 0.0
        %1447 = vmatpush1.msra.mxu0 0.0
        %1448 = vmatprep.subr.mxu0 0.0
        %1449 = vmatpush1.msra.mxu0 0.0
        %1450 = vmatprep.subr.mxu0 0.0
        %1451 = vmatpush1.msra.mxu0 0.0
        %1452 = vmatprep.subr.mxu0 0.0
        %1453 = vmatpush1.msra.mxu0 0.0
        %1454 = vmatprep.subr.mxu0 0.0
        %1455 = vmatpush1.msra.mxu0 0.0
        %1456 = vmatprep.subr.mxu0 0.0
        %1457 = vmatpush1.msra.mxu0 0.0
        %1458 = vmatprep.subr.mxu0 0.0
        %1459 = vmatpush1.msra.mxu0 0.0
        %1460 = vmatprep.subr.mxu0 0.0
        %1461 = vmatpush1.msra.mxu0 0.0
        %1462 = vmatprep.subr.mxu0 0.0
        %1463 = vmatpush1.msra.mxu0 0.0
        %1464 = vmatprep.subr.mxu0 0.0
        %1465 = vmatpush1.msra.mxu0 0.0
        %1466 = vmatprep.subr.mxu0 0.0
        %1467 = vmatpush1.msra.mxu0 0.0
        %1468 = vmatprep.subr.mxu0 0.0
        %1469 = vmatpush1.msra.mxu0 0.0
        %1470 = vmatprep.subr.mxu0 0.0
        %1471 = vmatpush1.msra.mxu0 0.0
        %1472 = vmatprep.subr.mxu0 0.0
        %1473 = vmatpush1.msra.mxu0 0.0
        %1474 = vmatprep.subr.mxu0 0.0
        %1475 = vmatpush1.msra.mxu0 0.0
        %1476 = vmatprep.subr.mxu0 0.0
        %1477 = vmatpush1.msra.mxu0 0.0
        %1478 = vmatprep.subr.mxu0 0.0
        %1479 = vmatpush1.msra.mxu0 0.0
        %1480 = vmatprep.subr.mxu0 0.0
        %1481 = vmatpush1.msra.mxu0 0.0
        %1482 = vmatprep.subr.mxu0 0.0
        %1483 = vmatpush1.msra.mxu0 0.0
        %1484 = vmatprep.subr.mxu0 0.0
        %1485 = vmatpush1.msra.mxu0 0.0
        %1486 = vmatprep.subr.mxu0 0.0
        %1487 = vmatpush1.msra.mxu0 0.0
        %1488 = vmatprep.subr.mxu0 0.0
        %1489 = vmatpush1.msra.mxu0 0.0
        %1490 = vmatprep.subr.mxu0 0.0
        %1491 = vmatpush1.msra.mxu0 0.0
        %1492 = vmatprep.mubr.f32.mxu0 0.0
        %1493 = vmatmul.mubr.f32.gmra.mrb[0].mxu0 %v1426
        %v1494 = vpop.f32.mrb[0].mxu0
        %v1495 = vadd.f32 0.0, %v1494
        %v1496 = vpop.f32.mrb[0].mxu0
        %1497 = vdwg.mxu0
        %v1498 = vmul.f32 %v1276, 0.35355338
        %v1499 = vmul.f32 %v1349, 0.35355338
        %v1500 = vmul.f32 %v1422, 0.35355338
        %v1501 = vmul.f32 %v1495, 0.35355338
        %vm1502 = vcmp.eq.s32.totalorder %v959, 0
        %v1503 = vsel %vm1502, 1, 0
        %v1504 = vlaneseq
        %v1505 = vshrl.u32 %v1504, 7
        %v1506 = vsub.s32 0, %v1505
        %v1507 = vrot.slane %v1503, %v1506
        %vm1508 = vcmp.eq.s32.totalorder %v1507, 1
        %v1509 = vsel %vm1508, -1e+10, %v1498
        %v1510 = vsel %vm1508, -1e+10, %v1499
        %v1511 = vsel %vm1508, -1e+10, %v1500
        %v1512 = vsel %vm1508, -1e+10, %v1501
        %v1513 = vsel %vm1205, %v1509, -inf
        %1514 = vmax.xlane.f32.xlu0 %v1513
        %v1515 = vpop.xlane.xlu0 %1514
        %v1516 = vsel %vm1205, %v1510, -inf
        %1517 = vmax.xlane.f32.xlu0 %v1516
        %v1518 = vpop.xlane.xlu0 %1517
        %v1519 = vsel %vm1205, %v1511, -inf
        %1520 = vmax.xlane.f32.xlu0 %v1519
        %v1521 = vpop.xlane.xlu0 %1520
        %v1522 = vsel %vm1205, %v1512, -inf
        %1523 = vmax.xlane.f32.xlu0 %v1522
        %v1524 = vpop.xlane.xlu0 %1523
        %v1525 = vsub.f32 %v1509, %v1515
        %v1526 = vsub.f32 %v1510, %v1518
        %v1527 = vsub.f32 %v1511, %v1521
        %v1528 = vsub.f32 %v1512, %v1524
        %v1529 = vmul.f32 %v1525, 1.442695
        %v1530 = vpow.pop %v1529
        %v1531 = vmul.f32 %v1526, 1.442695
        %v1532 = vpow.pop %v1531
        %v1533 = vmul.f32 %v1527, 1.442695
        %v1534 = vpow.pop %v1533
        %v1535 = vmul.f32 %v1528, 1.442695
        %v1536 = vpow.pop %v1535
        %v1537 = vsel %vm1205, %v1530, 0.0
        %1538 = vadd.xlane.f32.xlu0 %v1537
        %v1539 = vpop.xlane.xlu0 %1538
        %v1540 = vsel %vm1205, %v1532, 0.0
        %1541 = vadd.xlane.f32.xlu0 %v1540
        %v1542 = vpop.xlane.xlu0 %1541
        %v1543 = vsel %vm1205, %v1534, 0.0
        %1544 = vadd.xlane.f32.xlu0 %v1543
        %v1545 = vpop.xlane.xlu0 %1544
        %v1546 = vsel %vm1205, %v1536, 0.0
        %1547 = vadd.xlane.f32.xlu0 %v1546
        %v1548 = vpop.xlane.xlu0 %1547
        %v1549 = vrcp.pop %v1539
        %v1550 = vrcp.pop %v1542
        %v1551 = vrcp.pop %v1545
        %v1552 = vrcp.pop %v1548
        %v1553 = vmul.f32 %v1530, %v1549
        %v1554 = vmul.f32 %v1532, %v1550
        %v1555 = vmul.f32 %v1534, %v1551
        %v1556 = vmul.f32 %v1536, %v1552
        %v1558 = vsel %vm1205, %v1069, 0
        %v1561 = vsel %vm1205, %v1553, 0
        %1563 = vmatprep.subr.mxu0 0.0
        %1564 = vmatpush1.xpose.msra.mxu0 %v1561
        %1565 = vmatprep.subr.mxu0 0.0
        %1566 = vmatpush1.xpose.msra.mxu0 0.0
        %1567 = vmatprep.subr.mxu0 0.0
        %1568 = vmatpush1.xpose.msra.mxu0 0.0
        %1569 = vmatprep.subr.mxu0 0.0
        %1570 = vmatpush1.xpose.msra.mxu0 0.0
        %1571 = vmatprep.subr.mxu0 0.0
        %1572 = vmatpush1.xpose.msra.mxu0 0.0
        %1573 = vmatprep.subr.mxu0 0.0
        %1574 = vmatpush1.xpose.msra.mxu0 0.0
        %1575 = vmatprep.subr.mxu0 0.0
        %1576 = vmatpush1.xpose.msra.mxu0 0.0
        %1577 = vmatprep.subr.mxu0 0.0
        %1578 = vmatpush1.xpose.msra.mxu0 0.0
        %1579 = vmatprep.subr.mxu0 0.0
        %1580 = vmatpush1.xpose.msra.mxu0 0.0
        %1581 = vmatprep.subr.mxu0 0.0
        %1582 = vmatpush1.xpose.msra.mxu0 0.0
        %1583 = vmatprep.subr.mxu0 0.0
        %1584 = vmatpush1.xpose.msra.mxu0 0.0
        %1585 = vmatprep.subr.mxu0 0.0
        %1586 = vmatpush1.xpose.msra.mxu0 0.0
        %1587 = vmatprep.subr.mxu0 0.0
        %1588 = vmatpush1.xpose.msra.mxu0 0.0
        %1589 = vmatprep.subr.mxu0 0.0
        %1590 = vmatpush1.xpose.msra.mxu0 0.0
        %1591 = vmatprep.subr.mxu0 0.0
        %1592 = vmatpush1.xpose.msra.mxu0 0.0
        %1593 = vmatprep.subr.mxu0 0.0
        %1594 = vmatpush1.xpose.msra.mxu0 0.0
        %1595 = vmatprep.subr.mxu0 0.0
        %1596 = vmatpush1.xpose.msra.mxu0 0.0
        %1597 = vmatprep.subr.mxu0 0.0
        %1598 = vmatpush1.xpose.msra.mxu0 0.0
        %1599 = vmatprep.subr.mxu0 0.0
        %1600 = vmatpush1.xpose.msra.mxu0 0.0
        %1601 = vmatprep.subr.mxu0 0.0
        %1602 = vmatpush1.xpose.msra.mxu0 0.0
        %1603 = vmatprep.subr.mxu0 0.0
        %1604 = vmatpush1.xpose.msra.mxu0 0.0
        %1605 = vmatprep.subr.mxu0 0.0
        %1606 = vmatpush1.xpose.msra.mxu0 0.0
        %1607 = vmatprep.subr.mxu0 0.0
        %1608 = vmatpush1.xpose.msra.mxu0 0.0
        %1609 = vmatprep.subr.mxu0 0.0
        %1610 = vmatpush1.xpose.msra.mxu0 0.0
        %1611 = vmatprep.subr.mxu0 0.0
        %1612 = vmatpush1.xpose.msra.mxu0 0.0
        %1613 = vmatprep.subr.mxu0 0.0
        %1614 = vmatpush1.xpose.msra.mxu0 0.0
        %1615 = vmatprep.subr.mxu0 0.0
        %1616 = vmatpush1.xpose.msra.mxu0 0.0
        %1617 = vmatprep.subr.mxu0 0.0
        %1618 = vmatpush1.xpose.msra.mxu0 0.0
        %1619 = vmatprep.subr.mxu0 0.0
        %1620 = vmatpush1.xpose.msra.mxu0 0.0
        %1621 = vmatprep.subr.mxu0 0.0
        %1622 = vmatpush1.xpose.msra.mxu0 0.0
        %1623 = vmatprep.subr.mxu0 0.0
        %1624 = vmatpush1.xpose.msra.mxu0 0.0
        %1625 = vmatprep.subr.mxu0 0.0
        %1626 = vmatpush1.xpose.msra.mxu0 0.0
        %1627 = vmatprep.mubr.f32.mxu0 0.0
        %1628 = vmatmul.mubr.f32.gmra.mrb[0].mxu0 %v1558
        %v1629 = vpop.f32.mrb[0].mxu0
        %v1630 = vadd.f32 0.0, %v1629
        %v1631 = vpop.f32.mrb[0].mxu0
        %1632 = vdwg.mxu0
        %v1634 = vsel %vm1205, %v1070, 0
        %v1637 = vsel %vm1205, %v1554, 0
        %1639 = vmatprep.subr.mxu0 0.0
        %1640 = vmatpush1.xpose.msra.mxu0 %v1637
        %1641 = vmatprep.subr.mxu0 0.0
        %1642 = vmatpush1.xpose.msra.mxu0 0.0
        %1643 = vmatprep.subr.mxu0 0.0
        %1644 = vmatpush1.xpose.msra.mxu0 0.0
        %1645 = vmatprep.subr.mxu0 0.0
        %1646 = vmatpush1.xpose.msra.mxu0 0.0
        %1647 = vmatprep.subr.mxu0 0.0
        %1648 = vmatpush1.xpose.msra.mxu0 0.0
        %1649 = vmatprep.subr.mxu0 0.0
        %1650 = vmatpush1.xpose.msra.mxu0 0.0
        %1651 = vmatprep.subr.mxu0 0.0
        %1652 = vmatpush1.xpose.msra.mxu0 0.0
        %1653 = vmatprep.subr.mxu0 0.0
        %1654 = vmatpush1.xpose.msra.mxu0 0.0
        %1655 = vmatprep.subr.mxu0 0.0
        %1656 = vmatpush1.xpose.msra.mxu0 0.0
        %1657 = vmatprep.subr.mxu0 0.0
        %1658 = vmatpush1.xpose.msra.mxu0 0.0
        %1659 = vmatprep.subr.mxu0 0.0
        %1660 = vmatpush1.xpose.msra.mxu0 0.0
        %1661 = vmatprep.subr.mxu0 0.0
        %1662 = vmatpush1.xpose.msra.mxu0 0.0
        %1663 = vmatprep.subr.mxu0 0.0
        %1664 = vmatpush1.xpose.msra.mxu0 0.0
        %1665 = vmatprep.subr.mxu0 0.0
        %1666 = vmatpush1.xpose.msra.mxu0 0.0
        %1667 = vmatprep.subr.mxu0 0.0
        %1668 = vmatpush1.xpose.msra.mxu0 0.0
        %1669 = vmatprep.subr.mxu0 0.0
        %1670 = vmatpush1.xpose.msra.mxu0 0.0
        %1671 = vmatprep.subr.mxu0 0.0
        %1672 = vmatpush1.xpose.msra.mxu0 0.0
        %1673 = vmatprep.subr.mxu0 0.0
        %1674 = vmatpush1.xpose.msra.mxu0 0.0
        %1675 = vmatprep.subr.mxu0 0.0
        %1676 = vmatpush1.xpose.msra.mxu0 0.0
        %1677 = vmatprep.subr.mxu0 0.0
        %1678 = vmatpush1.xpose.msra.mxu0 0.0
        %1679 = vmatprep.subr.mxu0 0.0
        %1680 = vmatpush1.xpose.msra.mxu0 0.0
        %1681 = vmatprep.subr.mxu0 0.0
        %1682 = vmatpush1.xpose.msra.mxu0 0.0
        %1683 = vmatprep.subr.mxu0 0.0
        %1684 = vmatpush1.xpose.msra.mxu0 0.0
        %1685 = vmatprep.subr.mxu0 0.0
        %1686 = vmatpush1.xpose.msra.mxu0 0.0
        %1687 = vmatprep.subr.mxu0 0.0
        %1688 = vmatpush1.xpose.msra.mxu0 0.0
        %1689 = vmatprep.subr.mxu0 0.0
        %1690 = vmatpush1.xpose.msra.mxu0 0.0
        %1691 = vmatprep.subr.mxu0 0.0
        %1692 = vmatpush1.xpose.msra.mxu0 0.0
        %1693 = vmatprep.subr.mxu0 0.0
        %1694 = vmatpush1.xpose.msra.mxu0 0.0
        %1695 = vmatprep.subr.mxu0 0.0
        %1696 = vmatpush1.xpose.msra.mxu0 0.0
        %1697 = vmatprep.subr.mxu0 0.0
        %1698 = vmatpush1.xpose.msra.mxu0 0.0
        %1699 = vmatprep.subr.mxu0 0.0
        %1700 = vmatpush1.xpose.msra.mxu0 0.0
        %1701 = vmatprep.subr.mxu0 0.0
        %1702 = vmatpush1.xpose.msra.mxu0 0.0
        %1703 = vmatprep.mubr.f32.mxu0 0.0
        %1704 = vmatmul.mubr.f32.gmra.mrb[0].mxu0 %v1634
        %v1705 = vpop.f32.mrb[0].mxu0
        %v1706 = vadd.f32 0.0, %v1705
        %v1707 = vpop.f32.mrb[0].mxu0
        %1708 = vdwg.mxu0
        %v1710 = vsel %vm1205, %v1071, 0
        %v1713 = vsel %vm1205, %v1555, 0
        %1715 = vmatprep.subr.mxu0 0.0
        %1716 = vmatpush1.xpose.msra.mxu0 %v1713
        %1717 = vmatprep.subr.mxu0 0.0
        %1718 = vmatpush1.xpose.msra.mxu0 0.0
        %1719 = vmatprep.subr.mxu0 0.0
        %1720 = vmatpush1.xpose.msra.mxu0 0.0
        %1721 = vmatprep.subr.mxu0 0.0
        %1722 = vmatpush1.xpose.msra.mxu0 0.0
        %1723 = vmatprep.subr.mxu0 0.0
        %1724 = vmatpush1.xpose.msra.mxu0 0.0
        %1725 = vmatprep.subr.mxu0 0.0
        %1726 = vmatpush1.xpose.msra.mxu0 0.0
        %1727 = vmatprep.subr.mxu0 0.0
        %1728 = vmatpush1.xpose.msra.mxu0 0.0
        %1729 = vmatprep.subr.mxu0 0.0
        %1730 = vmatpush1.xpose.msra.mxu0 0.0
        %1731 = vmatprep.subr.mxu0 0.0
        %1732 = vmatpush1.xpose.msra.mxu0 0.0
        %1733 = vmatprep.subr.mxu0 0.0
        %1734 = vmatpush1.xpose.msra.mxu0 0.0
        %1735 = vmatprep.subr.mxu0 0.0
        %1736 = vmatpush1.xpose.msra.mxu0 0.0
        %1737 = vmatprep.subr.mxu0 0.0
        %1738 = vmatpush1.xpose.msra.mxu0 0.0
        %1739 = vmatprep.subr.mxu0 0.0
        %1740 = vmatpush1.xpose.msra.mxu0 0.0
        %1741 = vmatprep.subr.mxu0 0.0
        %1742 = vmatpush1.xpose.msra.mxu0 0.0
        %1743 = vmatprep.subr.mxu0 0.0
        %1744 = vmatpush1.xpose.msra.mxu0 0.0
        %1745 = vmatprep.subr.mxu0 0.0
        %1746 = vmatpush1.xpose.msra.mxu0 0.0
        %1747 = vmatprep.subr.mxu0 0.0
        %1748 = vmatpush1.xpose.msra.mxu0 0.0
        %1749 = vmatprep.subr.mxu0 0.0
        %1750 = vmatpush1.xpose.msra.mxu0 0.0
        %1751 = vmatprep.subr.mxu0 0.0
        %1752 = vmatpush1.xpose.msra.mxu0 0.0
        %1753 = vmatprep.subr.mxu0 0.0
        %1754 = vmatpush1.xpose.msra.mxu0 0.0
        %1755 = vmatprep.subr.mxu0 0.0
        %1756 = vmatpush1.xpose.msra.mxu0 0.0
        %1757 = vmatprep.subr.mxu0 0.0
        %1758 = vmatpush1.xpose.msra.mxu0 0.0
        %1759 = vmatprep.subr.mxu0 0.0
        %1760 = vmatpush1.xpose.msra.mxu0 0.0
        %1761 = vmatprep.subr.mxu0 0.0
        %1762 = vmatpush1.xpose.msra.mxu0 0.0
        %1763 = vmatprep.subr.mxu0 0.0
        %1764 = vmatpush1.xpose.msra.mxu0 0.0
        %1765 = vmatprep.subr.mxu0 0.0
        %1766 = vmatpush1.xpose.msra.mxu0 0.0
        %1767 = vmatprep.subr.mxu0 0.0
        %1768 = vmatpush1.xpose.msra.mxu0 0.0
        %1769 = vmatprep.subr.mxu0 0.0
        %1770 = vmatpush1.xpose.msra.mxu0 0.0
        %1771 = vmatprep.subr.mxu0 0.0
        %1772 = vmatpush1.xpose.msra.mxu0 0.0
        %1773 = vmatprep.subr.mxu0 0.0
        %1774 = vmatpush1.xpose.msra.mxu0 0.0
        %1775 = vmatprep.subr.mxu0 0.0
        %1776 = vmatpush1.xpose.msra.mxu0 0.0
        %1777 = vmatprep.subr.mxu0 0.0
        %1778 = vmatpush1.xpose.msra.mxu0 0.0
        %1779 = vmatprep.mubr.f32.mxu0 0.0
        %1780 = vmatmul.mubr.f32.gmra.mrb[0].mxu0 %v1710
        %v1781 = vpop.f32.mrb[0].mxu0
        %v1782 = vadd.f32 0.0, %v1781
        %v1783 = vpop.f32.mrb[0].mxu0
        %1784 = vdwg.mxu0
        %v1786 = vsel %vm1205, %v1072, 0
        %v1789 = vsel %vm1205, %v1556, 0
        %1791 = vmatprep.subr.mxu0 0.0
        %1792 = vmatpush1.xpose.msra.mxu0 %v1789
        %1793 = vmatprep.subr.mxu0 0.0
        %1794 = vmatpush1.xpose.msra.mxu0 0.0
        %1795 = vmatprep.subr.mxu0 0.0
        %1796 = vmatpush1.xpose.msra.mxu0 0.0
        %1797 = vmatprep.subr.mxu0 0.0
        %1798 = vmatpush1.xpose.msra.mxu0 0.0
        %1799 = vmatprep.subr.mxu0 0.0
        %1800 = vmatpush1.xpose.msra.mxu0 0.0
        %1801 = vmatprep.subr.mxu0 0.0
        %1802 = vmatpush1.xpose.msra.mxu0 0.0
        %1803 = vmatprep.subr.mxu0 0.0
        %1804 = vmatpush1.xpose.msra.mxu0 0.0
        %1805 = vmatprep.subr.mxu0 0.0
        %1806 = vmatpush1.xpose.msra.mxu0 0.0
        %1807 = vmatprep.subr.mxu0 0.0
        %1808 = vmatpush1.xpose.msra.mxu0 0.0
        %1809 = vmatprep.subr.mxu0 0.0
        %1810 = vmatpush1.xpose.msra.mxu0 0.0
        %1811 = vmatprep.subr.mxu0 0.0
        %1812 = vmatpush1.xpose.msra.mxu0 0.0
        %1813 = vmatprep.subr.mxu0 0.0
        %1814 = vmatpush1.xpose.msra.mxu0 0.0
        %1815 = vmatprep.subr.mxu0 0.0
        %1816 = vmatpush1.xpose.msra.mxu0 0.0
        %1817 = vmatprep.subr.mxu0 0.0
        %1818 = vmatpush1.xpose.msra.mxu0 0.0
        %1819 = vmatprep.subr.mxu0 0.0
        %1820 = vmatpush1.xpose.msra.mxu0 0.0
        %1821 = vmatprep.subr.mxu0 0.0
        %1822 = vmatpush1.xpose.msra.mxu0 0.0
        %1823 = vmatprep.subr.mxu0 0.0
        %1824 = vmatpush1.xpose.msra.mxu0 0.0
        %1825 = vmatprep.subr.mxu0 0.0
        %1826 = vmatpush1.xpose.msra.mxu0 0.0
        %1827 = vmatprep.subr.mxu0 0.0
        %1828 = vmatpush1.xpose.msra.mxu0 0.0
        %1829 = vmatprep.subr.mxu0 0.0
        %1830 = vmatpush1.xpose.msra.mxu0 0.0
        %1831 = vmatprep.subr.mxu0 0.0
        %1832 = vmatpush1.xpose.msra.mxu0 0.0
        %1833 = vmatprep.subr.mxu0 0.0
        %1834 = vmatpush1.xpose.msra.mxu0 0.0
        %1835 = vmatprep.subr.mxu0 0.0
        %1836 = vmatpush1.xpose.msra.mxu0 0.0
        %1837 = vmatprep.subr.mxu0 0.0
        %1838 = vmatpush1.xpose.msra.mxu0 0.0
        %1839 = vmatprep.subr.mxu0 0.0
        %1840 = vmatpush1.xpose.msra.mxu0 0.0
        %1841 = vmatprep.subr.mxu0 0.0
        %1842 = vmatpush1.xpose.msra.mxu0 0.0
        %1843 = vmatprep.subr.mxu0 0.0
        %1844 = vmatpush1.xpose.msra.mxu0 0.0
        %1845 = vmatprep.subr.mxu0 0.0
        %1846 = vmatpush1.xpose.msra.mxu0 0.0
        %1847 = vmatprep.subr.mxu0 0.0
        %1848 = vmatpush1.xpose.msra.mxu0 0.0
        %1849 = vmatprep.subr.mxu0 0.0
        %1850 = vmatpush1.xpose.msra.mxu0 0.0
        %1851 = vmatprep.subr.mxu0 0.0
        %1852 = vmatpush1.xpose.msra.mxu0 0.0
        %1853 = vmatprep.subr.mxu0 0.0
        %1854 = vmatpush1.xpose.msra.mxu0 0.0
        %1855 = vmatprep.mubr.f32.mxu0 0.0
        %1856 = vmatmul.mubr.f32.gmra.mrb[0].mxu0 %v1786
        %v1857 = vpop.f32.mrb[0].mxu0
        %v1858 = vadd.f32 0.0, %v1857
        %v1859 = vpop.f32.mrb[0].mxu0
        %1860 = vdwg.mxu0
        %1861 = vxpose.xlu0.b32.start [1/16] %v1630, 128
        %1862 = vxpose.xlu0.b32.cont [2/16] %v1706, 128
        %1863 = vxpose.xlu0.b32.cont [3/16] %v1782, 128
        %1864 = vxpose.xlu0.b32.cont [4/16] %v1858, 128
        %1865 = vxpose.xlu0.b32.cont [5/16] 0.0, 128
        %1866 = vxpose.xlu0.b32.cont [6/16] 0.0, 128
        %1867 = vxpose.xlu0.b32.cont [7/16] 0.0, 128
        %1868 = vxpose.xlu0.b32.cont [8/16] 0.0, 128
        %1869 = vxpose.xlu0.b32.cont [9/16] 0.0, 128
        %1870 = vxpose.xlu0.b32.cont [10/16] 0.0, 128
        %1871 = vxpose.xlu0.b32.cont [11/16] 0.0, 128
        %1872 = vxpose.xlu0.b32.cont [12/16] 0.0, 128
        %1873 = vxpose.xlu0.b32.cont [13/16] 0.0, 128
        %1874 = vxpose.xlu0.b32.cont [14/16] 0.0, 128
        %1875 = vxpose.xlu0.b32.cont [15/16] 0.0, 128
        %1876 = vxpose.xlu0.b32.end [16/16] 0.0, 128
        %v1877 = vpop.trf.xlu0
        %v1878 = vpop.trf.xlu0
        %v1879 = vpop.trf.xlu0
        %v1880 = vpop.trf.xlu0
        %v1881 = vpop.trf.xlu0
        %v1882 = vpop.trf.xlu0
        %v1883 = vpop.trf.xlu0
        %v1884 = vpop.trf.xlu0
        %v1885 = vpop.trf.xlu0
        %v1886 = vpop.trf.xlu0
        %v1887 = vpop.trf.xlu0
        %v1888 = vpop.trf.xlu0
        %v1889 = vpop.trf.xlu0
        %v1890 = vpop.trf.xlu0
        %v1891 = vpop.trf.xlu0
        %v1892 = vpop.trf.xlu0
        %v1893 = vld [vmem:[%s893] sm:$0xff]
        %v1894 = vld [vmem:[%s893 + $0x8] sm:$0xff]
        %v1895 = vld [vmem:[%s893 + $0x10] sm:$0xff]
        %v1896 = vld [vmem:[%s893 + $0x18] sm:$0xff]
        %v1897 = vld [vmem:[%s896] sm:$0x1]
        %v1899 = vlaneseq
        %v1900 = vshrl.u32 %v1899, 7
        %v1901 = vsub.s32 0, %v1900
        %v1902 = vrot.slane %v1897, %v1901
        %v1905 = vsel %vm971, %v1877, 0
        %1907 = vmatprep.subr.mxu0 0.0
        %1908 = vmatpush1.msra.mxu0 %v1893
        %1909 = vmatprep.subr.mxu0 0.0
        %1910 = vmatpush1.msra.mxu0 %v1894
        %1911 = vmatprep.subr.mxu0 0.0
        %1912 = vmatpush1.msra.mxu0 %v1895
        %1913 = vmatprep.subr.mxu0 0.0
        %1914 = vmatpush1.msra.mxu0 %v1896
        %1915 = vmatprep.subr.mxu0 0.0
        %1916 = vmatpush1.msra.mxu0 0.0
        %1917 = vmatprep.subr.mxu0 0.0
        %1918 = vmatpush1.msra.mxu0 0.0
        %1919 = vmatprep.subr.mxu0 0.0
        %1920 = vmatpush1.msra.mxu0 0.0
        %1921 = vmatprep.subr.mxu0 0.0
        %1922 = vmatpush1.msra.mxu0 0.0
        %1923 = vmatprep.subr.mxu0 0.0
        %1924 = vmatpush1.msra.mxu0 0.0
        %1925 = vmatprep.subr.mxu0 0.0
        %1926 = vmatpush1.msra.mxu0 0.0
        %1927 = vmatprep.subr.mxu0 0.0
        %1928 = vmatpush1.msra.mxu0 0.0
        %1929 = vmatprep.subr.mxu0 0.0
        %1930 = vmatpush1.msra.mxu0 0.0
        %1931 = vmatprep.subr.mxu0 0.0
        %1932 = vmatpush1.msra.mxu0 0.0
        %1933 = vmatprep.subr.mxu0 0.0
        %1934 = vmatpush1.msra.mxu0 0.0
        %1935 = vmatprep.subr.mxu0 0.0
        %1936 = vmatpush1.msra.mxu0 0.0
        %1937 = vmatprep.subr.mxu0 0.0
        %1938 = vmatpush1.msra.mxu0 0.0
        %1939 = vmatprep.subr.mxu0 0.0
        %1940 = vmatpush1.msra.mxu0 0.0
        %1941 = vmatprep.subr.mxu0 0.0
        %1942 = vmatpush1.msra.mxu0 0.0
        %1943 = vmatprep.subr.mxu0 0.0
        %1944 = vmatpush1.msra.mxu0 0.0
        %1945 = vmatprep.subr.mxu0 0.0
        %1946 = vmatpush1.msra.mxu0 0.0
        %1947 = vmatprep.subr.mxu0 0.0
        %1948 = vmatpush1.msra.mxu0 0.0
        %1949 = vmatprep.subr.mxu0 0.0
        %1950 = vmatpush1.msra.mxu0 0.0
        %1951 = vmatprep.subr.mxu0 0.0
        %1952 = vmatpush1.msra.mxu0 0.0
        %1953 = vmatprep.subr.mxu0 0.0
        %1954 = vmatpush1.msra.mxu0 0.0
        %1955 = vmatprep.subr.mxu0 0.0
        %1956 = vmatpush1.msra.mxu0 0.0
        %1957 = vmatprep.subr.mxu0 0.0
        %1958 = vmatpush1.msra.mxu0 0.0
        %1959 = vmatprep.subr.mxu0 0.0
        %1960 = vmatpush1.msra.mxu0 0.0
        %1961 = vmatprep.subr.mxu0 0.0
        %1962 = vmatpush1.msra.mxu0 0.0
        %1963 = vmatprep.subr.mxu0 0.0
        %1964 = vmatpush1.msra.mxu0 0.0
        %1965 = vmatprep.subr.mxu0 0.0
        %1966 = vmatpush1.msra.mxu0 0.0
        %1967 = vmatprep.subr.mxu0 0.0
        %1968 = vmatpush1.msra.mxu0 0.0
        %1969 = vmatprep.subr.mxu0 0.0
        %1970 = vmatpush1.msra.mxu0 0.0
        %1971 = vmatprep.mubr.f32.mxu0 0.0
        %1972 = vmatmul.mubr.f32.gmra.mrb[0].mxu0 %v1905
        %v1973 = vpop.f32.mrb[0].mxu0
        %v1974 = vadd.f32 %v1902, %v1973
        %v1975 = vpop.f32.mrb[0].mxu0
        %1976 = vdwg.mxu0
        %v1977 = vld [vmem:[%s901] sm:$0xff]
        %v1978 = vld [vmem:[%s901 + $0x8] sm:$0xff]
        %v1979 = vld [vmem:[%s901 + $0x10] sm:$0xff]
        %v1980 = vld [vmem:[%s901 + $0x18] sm:$0xff]
        %v1981 = vld [vmem:[%s906] sm:$0xff]
        %v1982 = vld [vmem:[%s906 + $0x8] sm:$0xff]
        %v1983 = vld [vmem:[%s906 + $0x10] sm:$0xff]
        %v1984 = vld [vmem:[%s906 + $0x18] sm:$0xff]
        %1985 = vmatprep.subr.mxu0 0.0
        %1986 = vmatpush1.msra.mxu0 %v1981
        %1987 = vmatprep.subr.mxu0 0.0
        %1988 = vmatpush1.msra.mxu0 %v1982
        %1989 = vmatprep.subr.mxu0 0.0
        %1990 = vmatpush1.msra.mxu0 %v1983
        %1991 = vmatprep.subr.mxu0 0.0
        %1992 = vmatpush1.msra.mxu0 %v1984
        %1993 = vmatprep.subr.mxu0 0.0
        %1994 = vmatpush1.msra.mxu0 0.0
        %1995 = vmatprep.subr.mxu0 0.0
        %1996 = vmatpush1.msra.mxu0 0.0
        %1997 = vmatprep.subr.mxu0 0.0
        %1998 = vmatpush1.msra.mxu0 0.0
        %1999 = vmatprep.subr.mxu0 0.0
        %2000 = vmatpush1.msra.mxu0 0.0
        %2001 = vmatprep.subr.mxu0 0.0
        %2002 = vmatpush1.msra.mxu0 0.0
        %2003 = vmatprep.subr.mxu0 0.0
        %2004 = vmatpush1.msra.mxu0 0.0
        %2005 = vmatprep.subr.mxu0 0.0
        %2006 = vmatpush1.msra.mxu0 0.0
        %2007 = vmatprep.subr.mxu0 0.0
        %2008 = vmatpush1.msra.mxu0 0.0
        %2009 = vmatprep.subr.mxu0 0.0
        %2010 = vmatpush1.msra.mxu0 0.0
        %2011 = vmatprep.subr.mxu0 0.0
        %2012 = vmatpush1.msra.mxu0 0.0
        %2013 = vmatprep.subr.mxu0 0.0
        %2014 = vmatpush1.msra.mxu0 0.0
        %2015 = vmatprep.subr.mxu0 0.0
        %2016 = vmatpush1.msra.mxu0 0.0
        %2017 = vmatprep.subr.mxu0 0.0
        %2018 = vmatpush1.msra.mxu0 0.0
        %2019 = vmatprep.subr.mxu0 0.0
        %2020 = vmatpush1.msra.mxu0 0.0
        %2021 = vmatprep.subr.mxu0 0.0
        %2022 = vmatpush1.msra.mxu0 0.0
        %2023 = vmatprep.subr.mxu0 0.0
        %2024 = vmatpush1.msra.mxu0 0.0
        %2025 = vmatprep.subr.mxu0 0.0
        %2026 = vmatpush1.msra.mxu0 0.0
        %2027 = vmatprep.subr.mxu0 0.0
        %2028 = vmatpush1.msra.mxu0 0.0
        %2029 = vmatprep.subr.mxu0 0.0
        %2030 = vmatpush1.msra.mxu0 0.0
        %2031 = vmatprep.subr.mxu0 0.0
        %2032 = vmatpush1.msra.mxu0 0.0
        %2033 = vmatprep.subr.mxu0 0.0
        %2034 = vmatpush1.msra.mxu0 0.0
        %2035 = vmatprep.subr.mxu0 0.0
        %2036 = vmatpush1.msra.mxu0 0.0
        %2037 = vmatprep.subr.mxu0 0.0
        %2038 = vmatpush1.msra.mxu0 0.0
        %2039 = vmatprep.subr.mxu0 0.0
        %2040 = vmatpush1.msra.mxu0 0.0
        %2041 = vmatprep.subr.mxu0 0.0
        %2042 = vmatpush1.msra.mxu0 0.0
        %2043 = vmatprep.subr.mxu0 0.0
        %2044 = vmatpush1.msra.mxu0 0.0
        %2045 = vmatprep.subr.mxu0 0.0
        %2046 = vmatpush1.msra.mxu0 0.0
        %2047 = vmatprep.subr.mxu0 0.0
        %2048 = vmatpush1.msra.mxu0 0.0
        %2049 = vmatprep.mubr.f32.mxu0 0.0
        %2050 = vmatmul.mubr.f32.gmra.mrb[0].mxu0 %v973
        %v2051 = vpop.f32.mrb[0].mxu0
        %v2052 = vadd.f32 0.0, %v2051
        %v2053 = vpop.f32.mrb[0].mxu0
        %2054 = vdwg.mxu0
        %v2056 = vsel %vm971, %v1974, 0
        %2058 = vmatprep.subr.mxu0 0.0
        %2059 = vmatpush1.msra.mxu0 %v1977
        %2060 = vmatprep.subr.mxu0 0.0
        %2061 = vmatpush1.msra.mxu0 %v1978
        %2062 = vmatprep.subr.mxu0 0.0
        %2063 = vmatpush1.msra.mxu0 %v1979
        %2064 = vmatprep.subr.mxu0 0.0
        %2065 = vmatpush1.msra.mxu0 %v1980
        %2066 = vmatprep.subr.mxu0 0.0
        %2067 = vmatpush1.msra.mxu0 0.0
        %2068 = vmatprep.subr.mxu0 0.0
        %2069 = vmatpush1.msra.mxu0 0.0
        %2070 = vmatprep.subr.mxu0 0.0
        %2071 = vmatpush1.msra.mxu0 0.0
        %2072 = vmatprep.subr.mxu0 0.0
        %2073 = vmatpush1.msra.mxu0 0.0
        %2074 = vmatprep.subr.mxu0 0.0
        %2075 = vmatpush1.msra.mxu0 0.0
        %2076 = vmatprep.subr.mxu0 0.0
        %2077 = vmatpush1.msra.mxu0 0.0
        %2078 = vmatprep.subr.mxu0 0.0
        %2079 = vmatpush1.msra.mxu0 0.0
        %2080 = vmatprep.subr.mxu0 0.0
        %2081 = vmatpush1.msra.mxu0 0.0
        %2082 = vmatprep.subr.mxu0 0.0
        %2083 = vmatpush1.msra.mxu0 0.0
        %2084 = vmatprep.subr.mxu0 0.0
        %2085 = vmatpush1.msra.mxu0 0.0
        %2086 = vmatprep.subr.mxu0 0.0
        %2087 = vmatpush1.msra.mxu0 0.0
        %2088 = vmatprep.subr.mxu0 0.0
        %2089 = vmatpush1.msra.mxu0 0.0
        %2090 = vmatprep.subr.mxu0 0.0
        %2091 = vmatpush1.msra.mxu0 0.0
        %2092 = vmatprep.subr.mxu0 0.0
        %2093 = vmatpush1.msra.mxu0 0.0
        %2094 = vmatprep.subr.mxu0 0.0
        %2095 = vmatpush1.msra.mxu0 0.0
        %2096 = vmatprep.subr.mxu0 0.0
        %2097 = vmatpush1.msra.mxu0 0.0
        %2098 = vmatprep.subr.mxu0 0.0
        %2099 = vmatpush1.msra.mxu0 0.0
        %2100 = vmatprep.subr.mxu0 0.0
        %2101 = vmatpush1.msra.mxu0 0.0
        %2102 = vmatprep.subr.mxu0 0.0
        %2103 = vmatpush1.msra.mxu0 0.0
        %2104 = vmatprep.subr.mxu0 0.0
        %2105 = vmatpush1.msra.mxu0 0.0
        %2106 = vmatprep.subr.mxu0 0.0
        %2107 = vmatpush1.msra.mxu0 0.0
        %2108 = vmatprep.subr.mxu0 0.0
        %2109 = vmatpush1.msra.mxu0 0.0
        %2110 = vmatprep.subr.mxu0 0.0
        %2111 = vmatpush1.msra.mxu0 0.0
        %2112 = vmatprep.subr.mxu0 0.0
        %2113 = vmatpush1.msra.mxu0 0.0
        %2114 = vmatprep.subr.mxu0 0.0
        %2115 = vmatpush1.msra.mxu0 0.0
        %2116 = vmatprep.subr.mxu0 0.0
        %2117 = vmatpush1.msra.mxu0 0.0
        %2118 = vmatprep.subr.mxu0 0.0
        %2119 = vmatpush1.msra.mxu0 0.0
        %2120 = vmatprep.subr.mxu0 0.0
        %2121 = vmatpush1.msra.mxu0 0.0
        %2122 = vmatprep.mubr.f32.mxu0 0.0
        %2123 = vmatmul.mubr.f32.gmra.mrb[0].mxu0 %v2056
        %v2124 = vpop.f32.mrb[0].mxu0
        %v2125 = vadd.f32 %v2052, %v2124
        %v2126 = vpop.f32.mrb[0].mxu0
        %2127 = vdwg.mxu0
        %v2128 = vld [vmem:[%s909] sm:$0x1]
        %v2130 = vlaneseq
        %v2131 = vshrl.u32 %v2130, 7
        %v2132 = vsub.s32 0, %v2131
        %v2133 = vrot.slane %v2128, %v2132
        %v2135 = vadd.f32 %v2125, %v2133
        %v2136 = vxor.u32 %v2135, 2147483648
        %v2137 = vmul.f32 %v2136, 1.442695
        %v2138 = vpow.pop %v2137
        %v2139 = vadd.f32 %v2138, 1.0
        %v2140 = vrcp.pop %v2139
        %v2141 = vmul.f32 1.0, %v2140
        %v2142 = vld [vmem:[%s914] sm:$0xff]
        %v2143 = vld [vmem:[%s914 + $0x8] sm:$0xff]
        %v2144 = vld [vmem:[%s914 + $0x10] sm:$0xff]
        %v2145 = vld [vmem:[%s914 + $0x18] sm:$0xff]
        %v2146 = vld [vmem:[%s919] sm:$0xff]
        %v2147 = vld [vmem:[%s919 + $0x8] sm:$0xff]
        %v2148 = vld [vmem:[%s919 + $0x10] sm:$0xff]
        %v2149 = vld [vmem:[%s919 + $0x18] sm:$0xff]
        %2150 = vmatprep.subr.mxu0 0.0
        %2151 = vmatpush1.msra.mxu0 %v2146
        %2152 = vmatprep.subr.mxu0 0.0
        %2153 = vmatpush1.msra.mxu0 %v2147
        %2154 = vmatprep.subr.mxu0 0.0
        %2155 = vmatpush1.msra.mxu0 %v2148
        %2156 = vmatprep.subr.mxu0 0.0
        %2157 = vmatpush1.msra.mxu0 %v2149
        %2158 = vmatprep.subr.mxu0 0.0
        %2159 = vmatpush1.msra.mxu0 0.0
        %2160 = vmatprep.subr.mxu0 0.0
        %2161 = vmatpush1.msra.mxu0 0.0
        %2162 = vmatprep.subr.mxu0 0.0
        %2163 = vmatpush1.msra.mxu0 0.0
        %2164 = vmatprep.subr.mxu0 0.0
        %2165 = vmatpush1.msra.mxu0 0.0
        %2166 = vmatprep.subr.mxu0 0.0
        %2167 = vmatpush1.msra.mxu0 0.0
        %2168 = vmatprep.subr.mxu0 0.0
        %2169 = vmatpush1.msra.mxu0 0.0
        %2170 = vmatprep.subr.mxu0 0.0
        %2171 = vmatpush1.msra.mxu0 0.0
        %2172 = vmatprep.subr.mxu0 0.0
        %2173 = vmatpush1.msra.mxu0 0.0
        %2174 = vmatprep.subr.mxu0 0.0
        %2175 = vmatpush1.msra.mxu0 0.0
        %2176 = vmatprep.subr.mxu0 0.0
        %2177 = vmatpush1.msra.mxu0 0.0
        %2178 = vmatprep.subr.mxu0 0.0
        %2179 = vmatpush1.msra.mxu0 0.0
        %2180 = vmatprep.subr.mxu0 0.0
        %2181 = vmatpush1.msra.mxu0 0.0
        %2182 = vmatprep.subr.mxu0 0.0
        %2183 = vmatpush1.msra.mxu0 0.0
        %2184 = vmatprep.subr.mxu0 0.0
        %2185 = vmatpush1.msra.mxu0 0.0
        %2186 = vmatprep.subr.mxu0 0.0
        %2187 = vmatpush1.msra.mxu0 0.0
        %2188 = vmatprep.subr.mxu0 0.0
        %2189 = vmatpush1.msra.mxu0 0.0
        %2190 = vmatprep.subr.mxu0 0.0
        %2191 = vmatpush1.msra.mxu0 0.0
        %2192 = vmatprep.subr.mxu0 0.0
        %2193 = vmatpush1.msra.mxu0 0.0
        %2194 = vmatprep.subr.mxu0 0.0
        %2195 = vmatpush1.msra.mxu0 0.0
        %2196 = vmatprep.subr.mxu0 0.0
        %2197 = vmatpush1.msra.mxu0 0.0
        %2198 = vmatprep.subr.mxu0 0.0
        %2199 = vmatpush1.msra.mxu0 0.0
        %2200 = vmatprep.subr.mxu0 0.0
        %2201 = vmatpush1.msra.mxu0 0.0
        %2202 = vmatprep.subr.mxu0 0.0
        %2203 = vmatpush1.msra.mxu0 0.0
        %2204 = vmatprep.subr.mxu0 0.0
        %2205 = vmatpush1.msra.mxu0 0.0
        %2206 = vmatprep.subr.mxu0 0.0
        %2207 = vmatpush1.msra.mxu0 0.0
        %2208 = vmatprep.subr.mxu0 0.0
        %2209 = vmatpush1.msra.mxu0 0.0
        %2210 = vmatprep.subr.mxu0 0.0
        %2211 = vmatpush1.msra.mxu0 0.0
        %2212 = vmatprep.subr.mxu0 0.0
        %2213 = vmatpush1.msra.mxu0 0.0
        %2214 = vmatprep.mubr.f32.mxu0 0.0
        %2215 = vmatmul.mubr.f32.gmra.mrb[0].mxu0 %v973
        %v2216 = vpop.f32.mrb[0].mxu0
        %v2217 = vadd.f32 0.0, %v2216
        %v2218 = vpop.f32.mrb[0].mxu0
        %2219 = vdwg.mxu0
        %2220 = vmatprep.subr.mxu0 0.0
        %2221 = vmatpush1.msra.mxu0 %v2142
        %2222 = vmatprep.subr.mxu0 0.0
        %2223 = vmatpush1.msra.mxu0 %v2143
        %2224 = vmatprep.subr.mxu0 0.0
        %2225 = vmatpush1.msra.mxu0 %v2144
        %2226 = vmatprep.subr.mxu0 0.0
        %2227 = vmatpush1.msra.mxu0 %v2145
        %2228 = vmatprep.subr.mxu0 0.0
        %2229 = vmatpush1.msra.mxu0 0.0
        %2230 = vmatprep.subr.mxu0 0.0
        %2231 = vmatpush1.msra.mxu0 0.0
        %2232 = vmatprep.subr.mxu0 0.0
        %2233 = vmatpush1.msra.mxu0 0.0
        %2234 = vmatprep.subr.mxu0 0.0
        %2235 = vmatpush1.msra.mxu0 0.0
        %2236 = vmatprep.subr.mxu0 0.0
        %2237 = vmatpush1.msra.mxu0 0.0
        %2238 = vmatprep.subr.mxu0 0.0
        %2239 = vmatpush1.msra.mxu0 0.0
        %2240 = vmatprep.subr.mxu0 0.0
        %2241 = vmatpush1.msra.mxu0 0.0
        %2242 = vmatprep.subr.mxu0 0.0
        %2243 = vmatpush1.msra.mxu0 0.0
        %2244 = vmatprep.subr.mxu0 0.0
        %2245 = vmatpush1.msra.mxu0 0.0
        %2246 = vmatprep.subr.mxu0 0.0
        %2247 = vmatpush1.msra.mxu0 0.0
        %2248 = vmatprep.subr.mxu0 0.0
        %2249 = vmatpush1.msra.mxu0 0.0
        %2250 = vmatprep.subr.mxu0 0.0
        %2251 = vmatpush1.msra.mxu0 0.0
        %2252 = vmatprep.subr.mxu0 0.0
        %2253 = vmatpush1.msra.mxu0 0.0
        %2254 = vmatprep.subr.mxu0 0.0
        %2255 = vmatpush1.msra.mxu0 0.0
        %2256 = vmatprep.subr.mxu0 0.0
        %2257 = vmatpush1.msra.mxu0 0.0
        %2258 = vmatprep.subr.mxu0 0.0
        %2259 = vmatpush1.msra.mxu0 0.0
        %2260 = vmatprep.subr.mxu0 0.0
        %2261 = vmatpush1.msra.mxu0 0.0
        %2262 = vmatprep.subr.mxu0 0.0
        %2263 = vmatpush1.msra.mxu0 0.0
        %2264 = vmatprep.subr.mxu0 0.0
        %2265 = vmatpush1.msra.mxu0 0.0
        %2266 = vmatprep.subr.mxu0 0.0
        %2267 = vmatpush1.msra.mxu0 0.0
        %2268 = vmatprep.subr.mxu0 0.0
        %2269 = vmatpush1.msra.mxu0 0.0
        %2270 = vmatprep.subr.mxu0 0.0
        %2271 = vmatpush1.msra.mxu0 0.0
        %2272 = vmatprep.subr.mxu0 0.0
        %2273 = vmatpush1.msra.mxu0 0.0
        %2274 = vmatprep.subr.mxu0 0.0
        %2275 = vmatpush1.msra.mxu0 0.0
        %2276 = vmatprep.subr.mxu0 0.0
        %2277 = vmatpush1.msra.mxu0 0.0
        %2278 = vmatprep.subr.mxu0 0.0
        %2279 = vmatpush1.msra.mxu0 0.0
        %2280 = vmatprep.subr.mxu0 0.0
        %2281 = vmatpush1.msra.mxu0 0.0
        %2282 = vmatprep.subr.mxu0 0.0
        %2283 = vmatpush1.msra.mxu0 0.0
        %2284 = vmatprep.mubr.f32.mxu0 0.0
        %2285 = vmatmul.mubr.f32.gmra.mrb[0].mxu0 %v2056
        %v2286 = vpop.f32.mrb[0].mxu0
        %v2287 = vadd.f32 %v2217, %v2286
        %v2288 = vpop.f32.mrb[0].mxu0
        %2289 = vdwg.mxu0
        %v2290 = vld [vmem:[%s922] sm:$0x1]
        %v2292 = vlaneseq
        %v2293 = vshrl.u32 %v2292, 7
        %v2294 = vsub.s32 0, %v2293
        %v2295 = vrot.slane %v2290, %v2294
        %v2297 = vadd.f32 %v2287, %v2295
        %v2298 = vmul.f32 %v2141, %v2297
        %v2299 = vadd.f32 %v958, %v2298
        %v2300 = vsel %vm971, %v2299, 0.0
        %2301 = vadd.xlane.f32.xlu0 %v2300
        %v2302 = vpop.xlane.xlu0 %2301
        %v2303 = vrcp.pop 32.0
        %v2304 = vmul.f32 %v2302, %v2303
        %v2305 = vsub.f32 %v2299, %v2304
        %v2306 = vmul.f32 %v2305, %v2305
        %v2307 = vsel %vm971, %v2306, 0.0
        %2308 = vadd.xlane.f32.xlu0 %v2307
        %v2309 = vpop.xlane.xlu0 %2308
        %v2310 = vmul.f32 %v2309, %v2303
        %v2311 = vadd.f32 %v2310, 1e-05
        %v2312 = vrsqrt.pop %v2311
        %v2313 = vmul.f32 %v2305, %v2312
        %v2314 = vld [vmem:[%s925] sm:$0x1]
        %v2316 = vlaneseq
        %v2317 = vshrl.u32 %v2316, 7
        %v2318 = vsub.s32 0, %v2317
        %v2319 = vrot.slane %v2314, %v2318
        %v2321 = vmul.f32 %v2313, %v2319
        %v2322 = vld [vmem:[%s928] sm:$0x1]
        %v2324 = vlaneseq
        %v2325 = vshrl.u32 %v2324, 7
        %v2326 = vsub.s32 0, %v2325
        %v2327 = vrot.slane %v2322, %v2326
        %v2329 = vadd.f32 %v2321, %v2327
        %v2330 = vld [vmem:[%s933] sm:$0xff]
        %v2331 = vld [vmem:[%s933 + $0x8] sm:$0xff]
        %v2332 = vld [vmem:[%s933 + $0x10] sm:$0xff]
        %v2333 = vld [vmem:[%s933 + $0x18] sm:$0xff]
        %v2334 = vld [vmem:[%s936] sm:$0x1]
        %v2336 = vlaneseq
        %v2337 = vshrl.u32 %v2336, 7
        %v2338 = vsub.s32 0, %v2337
        %v2339 = vrot.slane %v2334, %v2338
        %v2342 = vsel %vm971, %v2329, 0
        %2344 = vmatprep.subr.mxu0 0.0
        %2345 = vmatpush1.msra.mxu0 %v2330
        %2346 = vmatprep.subr.mxu0 0.0
        %2347 = vmatpush1.msra.mxu0 %v2331
        %2348 = vmatprep.subr.mxu0 0.0
        %2349 = vmatpush1.msra.mxu0 %v2332
        %2350 = vmatprep.subr.mxu0 0.0
        %2351 = vmatpush1.msra.mxu0 %v2333
        %2352 = vmatprep.subr.mxu0 0.0
        %2353 = vmatpush1.msra.mxu0 0.0
        %2354 = vmatprep.subr.mxu0 0.0
        %2355 = vmatpush1.msra.mxu0 0.0
        %2356 = vmatprep.subr.mxu0 0.0
        %2357 = vmatpush1.msra.mxu0 0.0
        %2358 = vmatprep.subr.mxu0 0.0
        %2359 = vmatpush1.msra.mxu0 0.0
        %2360 = vmatprep.subr.mxu0 0.0
        %2361 = vmatpush1.msra.mxu0 0.0
        %2362 = vmatprep.subr.mxu0 0.0
        %2363 = vmatpush1.msra.mxu0 0.0
        %2364 = vmatprep.subr.mxu0 0.0
        %2365 = vmatpush1.msra.mxu0 0.0
        %2366 = vmatprep.subr.mxu0 0.0
        %2367 = vmatpush1.msra.mxu0 0.0
        %2368 = vmatprep.subr.mxu0 0.0
        %2369 = vmatpush1.msra.mxu0 0.0
        %2370 = vmatprep.subr.mxu0 0.0
        %2371 = vmatpush1.msra.mxu0 0.0
        %2372 = vmatprep.subr.mxu0 0.0
        %2373 = vmatpush1.msra.mxu0 0.0
        %2374 = vmatprep.subr.mxu0 0.0
        %2375 = vmatpush1.msra.mxu0 0.0
        %2376 = vmatprep.subr.mxu0 0.0
        %2377 = vmatpush1.msra.mxu0 0.0
        %2378 = vmatprep.subr.mxu0 0.0
        %2379 = vmatpush1.msra.mxu0 0.0
        %2380 = vmatprep.subr.mxu0 0.0
        %2381 = vmatpush1.msra.mxu0 0.0
        %2382 = vmatprep.subr.mxu0 0.0
        %2383 = vmatpush1.msra.mxu0 0.0
        %2384 = vmatprep.subr.mxu0 0.0
        %2385 = vmatpush1.msra.mxu0 0.0
        %2386 = vmatprep.subr.mxu0 0.0
        %2387 = vmatpush1.msra.mxu0 0.0
        %2388 = vmatprep.subr.mxu0 0.0
        %2389 = vmatpush1.msra.mxu0 0.0
        %2390 = vmatprep.subr.mxu0 0.0
        %2391 = vmatpush1.msra.mxu0 0.0
        %2392 = vmatprep.subr.mxu0 0.0
        %2393 = vmatpush1.msra.mxu0 0.0
        %2394 = vmatprep.subr.mxu0 0.0
        %2395 = vmatpush1.msra.mxu0 0.0
        %2396 = vmatprep.subr.mxu0 0.0
        %2397 = vmatpush1.msra.mxu0 0.0
        %2398 = vmatprep.subr.mxu0 0.0
        %2399 = vmatpush1.msra.mxu0 0.0
        %2400 = vmatprep.subr.mxu0 0.0
        %2401 = vmatpush1.msra.mxu0 0.0
        %2402 = vmatprep.subr.mxu0 0.0
        %2403 = vmatpush1.msra.mxu0 0.0
        %2404 = vmatprep.subr.mxu0 0.0
        %2405 = vmatpush1.msra.mxu0 0.0
        %2406 = vmatprep.subr.mxu0 0.0
        %2407 = vmatpush1.msra.mxu0 0.0
        %2408 = vmatprep.mubr.f32.mxu0 0.0
        %2409 = vmatmul.mubr.f32.gmra.mrb[0].mxu0 %v2342
        %v2410 = vpop.f32.mrb[0].mxu0
        %v2411 = vadd.f32 %v2339, %v2410
        %v2412 = vpop.f32.mrb[0].mxu0
        %2413 = vdwg.mxu0
        %v2414 = vmax.f32 %v2411, 0.0
        %v2415 = vld [vmem:[%s941] sm:$0xff]
        %v2416 = vld [vmem:[%s941 + $0x8] sm:$0xff]
        %v2417 = vld [vmem:[%s941 + $0x10] sm:$0xff]
        %v2418 = vld [vmem:[%s941 + $0x18] sm:$0xff]
        %v2419 = vld [vmem:[%s941 + $0x20] sm:$0xff]
        %v2420 = vld [vmem:[%s941 + $0x28] sm:$0xff]
        %v2421 = vld [vmem:[%s941 + $0x30] sm:$0xff]
        %v2422 = vld [vmem:[%s941 + $0x38] sm:$0xff]
        %v2423 = vld [vmem:[%s944] sm:$0x1]
        %v2425 = vlaneseq
        %v2426 = vshrl.u32 %v2425, 7
        %v2427 = vsub.s32 0, %v2426
        %v2428 = vrot.slane %v2423, %v2427
        %vm2430 = vcmask 523264
        %v2432 = vsel %vm2430, %v2414, 0
        %2434 = vmatprep.subr.mxu0 0.0
        %2435 = vmatpush1.msra.mxu0 %v2415
        %2436 = vmatprep.subr.mxu0 0.0
        %2437 = vmatpush1.msra.mxu0 %v2416
        %2438 = vmatprep.subr.mxu0 0.0
        %2439 = vmatpush1.msra.mxu0 %v2417
        %2440 = vmatprep.subr.mxu0 0.0
        %2441 = vmatpush1.msra.mxu0 %v2418
        %2442 = vmatprep.subr.mxu0 0.0
        %2443 = vmatpush1.msra.mxu0 %v2419
        %2444 = vmatprep.subr.mxu0 0.0
        %2445 = vmatpush1.msra.mxu0 %v2420
        %2446 = vmatprep.subr.mxu0 0.0
        %2447 = vmatpush1.msra.mxu0 %v2421
        %2448 = vmatprep.subr.mxu0 0.0
        %2449 = vmatpush1.msra.mxu0 %v2422
        %2450 = vmatprep.subr.mxu0 0.0
        %2451 = vmatpush1.msra.mxu0 0.0
        %2452 = vmatprep.subr.mxu0 0.0
        %2453 = vmatpush1.msra.mxu0 0.0
        %2454 = vmatprep.subr.mxu0 0.0
        %2455 = vmatpush1.msra.mxu0 0.0
        %2456 = vmatprep.subr.mxu0 0.0
        %2457 = vmatpush1.msra.mxu0 0.0
        %2458 = vmatprep.subr.mxu0 0.0
        %2459 = vmatpush1.msra.mxu0 0.0
        %2460 = vmatprep.subr.mxu0 0.0
        %2461 = vmatpush1.msra.mxu0 0.0
        %2462 = vmatprep.subr.mxu0 0.0
        %2463 = vmatpush1.msra.mxu0 0.0
        %2464 = vmatprep.subr.mxu0 0.0
        %2465 = vmatpush1.msra.mxu0 0.0
        %2466 = vmatprep.subr.mxu0 0.0
        %2467 = vmatpush1.msra.mxu0 0.0
        %2468 = vmatprep.subr.mxu0 0.0
        %2469 = vmatpush1.msra.mxu0 0.0
        %2470 = vmatprep.subr.mxu0 0.0
        %2471 = vmatpush1.msra.mxu0 0.0
        %2472 = vmatprep.subr.mxu0 0.0
        %2473 = vmatpush1.msra.mxu0 0.0
        %2474 = vmatprep.subr.mxu0 0.0
        %2475 = vmatpush1.msra.mxu0 0.0
        %2476 = vmatprep.subr.mxu0 0.0
        %2477 = vmatpush1.msra.mxu0 0.0
        %2478 = vmatprep.subr.mxu0 0.0
        %2479 = vmatpush1.msra.mxu0 0.0
        %2480 = vmatprep.subr.mxu0 0.0
        %2481 = vmatpush1.msra.mxu0 0.0
        %2482 = vmatprep.subr.mxu0 0.0
        %2483 = vmatpush1.msra.mxu0 0.0
        %2484 = vmatprep.subr.mxu0 0.0
        %2485 = vmatpush1.msra.mxu0 0.0
        %2486 = vmatprep.subr.mxu0 0.0
        %2487 = vmatpush1.msra.mxu0 0.0
        %2488 = vmatprep.subr.mxu0 0.0
        %2489 = vmatpush1.msra.mxu0 0.0
        %2490 = vmatprep.subr.mxu0 0.0
        %2491 = vmatpush1.msra.mxu0 0.0
        %2492 = vmatprep.subr.mxu0 0.0
        %2493 = vmatpush1.msra.mxu0 0.0
        %2494 = vmatprep.subr.mxu0 0.0
        %2495 = vmatpush1.msra.mxu0 0.0
        %2496 = vmatprep.subr.mxu0 0.0
        %2497 = vmatpush1.msra.mxu0 0.0
        %2498 = vmatprep.mubr.f32.mxu0 0.0
        %2499 = vmatmul.mubr.f32.gmra.mrb[0].mxu0 %v2432
        %v2500 = vpop.f32.mrb[0].mxu0
        %v2501 = vadd.f32 %v2428, %v2500
        %v2502 = vpop.f32.mrb[0].mxu0
        %2503 = vdwg.mxu0
        %v2504 = vmax.f32 %v2501, 0.0
        %v2505 = vadd.f32 %v2329, %v2504
        %v2506 = vsel %vm971, %v2505, 0.0
        %2507 = vadd.xlane.f32.xlu0 %v2506
        %v2508 = vpop.xlane.xlu0 %2507
        %v2509 = vmul.f32 %v2508, %v2303
        %v2510 = vsub.f32 %v2505, %v2509
        %v2511 = vmul.f32 %v2510, %v2510
        %v2512 = vsel %vm971, %v2511, 0.0
        %2513 = vadd.xlane.f32.xlu0 %v2512
        %v2514 = vpop.xlane.xlu0 %2513
        %v2515 = vmul.f32 %v2514, %v2303
        %v2516 = vadd.f32 %v2515, 1e-05
        %v2517 = vrsqrt.pop %v2516
        %v2518 = vmul.f32 %v2510, %v2517
        %v2519 = vld [vmem:[%s947] sm:$0x1]
        %v2521 = vlaneseq
        %v2522 = vshrl.u32 %v2521, 7
        %v2523 = vsub.s32 0, %v2522
        %v2524 = vrot.slane %v2519, %v2523
        %v2526 = vmul.f32 %v2518, %v2524
        %v2527 = vld [vmem:[%s950] sm:$0x1]
        %v2529 = vlaneseq
        %v2530 = vshrl.u32 %v2529, 7
        %v2531 = vsub.s32 0, %v2530
        %v2532 = vrot.slane %v2527, %v2531
        %v2534 = vadd.f32 %v2526, %v2532
        %2535 = vst.msk [vmem:[#allocation2] sm:$0xff] %vm971, %v2534
        %2536 = vst.msk [vmem:[%s873] sm:$0xff] %vm971, %v2534
        %s2537 = sand.u32 %s574, 1
        %s2538 = scalar_lea.sflag [#allocation4], %s2537
        %s2539 = sand.u32 %s574, 1
        %s2540 = smul.addr %s2539, 8
        %s2541 = scalar_lea.vmem [#allocation3], %s2540
        // Predicated region
        $region105: #{encoder_forward.1} parent=99 // pred_check
          %p2542 = pneg %p584
        $region106: #{encoder_forward.1} parent=99 // pred_check_branch
          %2544 = sbr.rel (%p2542) target = $region108
        $region107: #{encoder_forward.1} parent=99 // pred_region
          %s2546 = ssub.s32 128, 128
          %2547 = vsyncadd %s2538, %s2546
          %s2548 = smul.addr %s38, 128
          %s2549 = scalar_lea.hbm %s20, %s2548
          %s2551 = sshll.u32 %s2541, 4
          %s2552 = int_to_ptr.vmem [resolvable:$true] %s2551
          %2554 = dma.vmem_to_hbm [thread:$0]  %s2552, 128, %s2549, %s2538
        $region108: #{encoder_forward.1} parent=99 // pred_fallthru
          _
      $region100: #{encoder_forward.1} parent=5 // pred_fallthru
        _
      %p2555 = scmp.le.s32.totalorder 2, %s29
      // Predicated region
      $region109: #{encoder_forward.1} parent=5 // pred_check
        %p2556 = pneg %p2555
      $region110: #{encoder_forward.1} parent=5 // pred_check_branch
        %2558 = sbr.rel (%p2556) target = $region112
      $region111: #{encoder_forward.1} parent=5 // pred_region
        %s2559 = ssub.s32 %s29, 2
        // Predicated region
        $region113: #{encoder_forward.1} parent=111 // pred_check
          %p2560 = pneg %p590
        $region114: #{encoder_forward.1} parent=111 // pred_check_branch
          %2562 = sbr.rel (%p2560) target = $region116
        $region115: #{encoder_forward.1} parent=111 // pred_region
          %s2563 = sand.u32 %s575, 1
          %s2564 = scalar_lea.sflag [#allocation4], %s2563
          %s2565 = sand.u32 %s575, 1
          %s2566 = smul.addr %s2565, 8
          %s2567 = scalar_lea.vmem [#allocation3], %s2566
          %2568 = dma.done %s2564, 128
        $region116: #{encoder_forward.1} parent=111 // pred_fallthru
          _
      $region112: #{encoder_forward.1} parent=5 // pred_fallthru
        _
    $region6: #{encoder_forward.1} parent=1 // loop_footer
      %s33 = sadd.s32 1, %s29
    $region7: #{encoder_forward.1} parent=1 // loop_footer_branch
      %28 = sbr.rel target = $region3
    $region8: #{encoder_forward.1} parent=1 // loop_exit
      _
    %2569 = vsyncpa [#allocation4], 1
    %s2570 = scalar_lea.sflag [#allocation4], 1
    %2571 = vsyncpa %s2570, 1

</llo_original>
